<compile_context>
chip_gen: v7x
topology: tpu7x:2x2x1
jax: 0.10.0
libtpu: 0.0.40
codegen_flags: <defaults>
</compile_context>

<pallas_src>
import math

import jax
import jax.numpy as jnp
from jax import lax
from jax.experimental import pallas as pl
from jax.experimental.pallas import tpu as pltpu

D_IN = 48   # input / output feature width
D_K = 8     # per-head key/query/value width


def _round_up(n, m):
    return ((n + m - 1) // m) * m


def ultimus_kernel(kqv_q_ref, kqv_kv_ref, mask_ref, wo_ref, bo_ref, o_ref):
    """One grid step: TQ query rows against all (padded, resident) P keys/values.

    kqv_q_ref : (TQ, 24) per-step tile of the precomputed K|Q|V projection (q rows).
    kqv_kv_ref: (P, 24)  resident precomputed K|Q|V projection (keys / values).
    mask_ref  : (1, P)   additive key mask (0 for real columns, -1e30 for padding).
    wo_ref    : (48, 8)  output projection weight (PyTorch (out, in) layout).
    bo_ref    : (48, 1)  output projection bias.
    o_ref     : (48, TQ) transposed, lane-dense output tile.
    """
    kv = kqv_kv_ref[...]                              # (P, 24)
    k = kv[:, 0:D_K]                                  # (P, 8)
    v = kv[:, 2 * D_K:3 * D_K]                        # (P, 8)
    q = kqv_q_ref[...][:, D_K:2 * D_K]                # (TQ, 8); 1/sqrt(d_k) already folded in

    # logits = q @ k^T, contracting the minor dims (no materialized transpose of k).
    logits = lax.dot_general(q, k,
                             dimension_numbers=(((1,), (1,)), ((), ())),
                             preferred_element_type=jnp.float32)              # (TQ, P)
    logits = logits + mask_ref[...]                    # mask out padded key columns

    # Numerically stable softmax over the key dim; divide via EUP reciprocal + 1 Newton step.
    m = jnp.max(logits, axis=1, keepdims=True)
    e = jnp.exp(logits - m)
    denom = jnp.sum(e, axis=1, keepdims=True)
    r = pl.reciprocal(denom, approx=True)
    r = r * (2.0 - denom * r)                          # refine on the thin (TQ, 1) column
    score = e * r

    attn = jnp.dot(score, v, preferred_element_type=jnp.float32)              # (TQ, 8)

    # Transposed output so the store is lane-dense: out_T = Wo @ attn^T + bo  -> (48, TQ).
    out_t = lax.dot_general(wo_ref[...], attn,
                            dimension_numbers=(((1,), (1,)), ((), ())),
                            preferred_element_type=jnp.float32) + bo_ref[...]
    o_ref[...] = out_t.astype(o_ref.dtype)


def _vmem_physical_bytes():
    try:
        return int(pltpu.get_tpu_info().vmem_capacity_bytes)
    except Exception:
        return 64 * 1024 * 1024   # conservative: assume v7x-class 64 MiB per TensorCore


def _vmem_estimate(tq, p, kqv_bufs):
    f32 = 4
    return (4 * tq * p * f32                    # logits / exp / score working set + slack
            + kqv_bufs * p * (3 * D_K) * f32    # resident kqv block
            + kqv_bufs * p * f32                # additive key-mask row
            + 2 * tq * (3 * D_K) * f32          # double-buffered q tile
            + 2 * D_IN * tq * f32               # double-buffered transposed output tile
            + (2 << 20))                        # weights, biases, compiler scratch headroom


def ultimus_forward(x, params):
    """x: (B, 48) float32. params: dict of weights/biases (PyTorch nn.Linear layout)."""
    B = x.shape[0]

    # ---- wrapper-side glue: pack weights, fold the softmax scale into Wq / bq ----
    scale = 1.0 / math.sqrt(float(D_K))
    wqkv = jnp.concatenate(
        [params["wk"].T, params["wq"].T * scale, params["wv"].T], axis=1)       # (48, 24)
    bqkv = jnp.concatenate(
        [params["bk"], params["bq"] * scale, params["bv"]]).reshape(1, 3 * D_K)  # (1, 24)
    wo = params["wo"]                                                           # (48, 8)
    bo = params["bo"].reshape(D_IN, 1)                                          # (48, 1)

    # ---- lane-dense tiling: key axis and query tile both multiples of 128 ----
    vmem_cap = int(_vmem_physical_bytes() * 3 // 4)   # ~48 MiB on v7x, ~96 MiB on v5e/v6e
    p_keys = _round_up(B, 128)
    candidates = [t for t in (512, 384, 256, 128) if t <= p_keys] or [p_keys]
    TQ = candidates[-1]
    for t in candidates:
        if _vmem_estimate(t, _round_up(B, t), 2) <= vmem_cap:
            TQ = t
            break
    P = _round_up(B, TQ)

    if _vmem_estimate(TQ, P, 1) > vmem_cap:
        # TODO(synk): split the key axis onto a second ("arbitrary") grid dim with an
        # online-softmax accumulator for batches that do not fit with all keys resident.
        raise ValueError(
            f"Ultimus Pallas kernel: batch {B} needs ~{_vmem_estimate(TQ, P, 1) >> 20} MiB "
            f"of VMEM with all keys resident, exceeding the ~{vmem_cap >> 20} MiB budget.")

    # ---- hoisted full-batch K|Q|V projection (one tiny XLA matmul, reused by every tile) ----
    x_p = jnp.pad(x, ((0, P - B), (0, 0))) if P != B else x
    kqv = (x_p @ wqkv + bqkv).astype(jnp.float32)                               # (P, 24)
    mask = jnp.where(jnp.arange(P) < B, 0.0, -1e30).astype(jnp.float32).reshape(1, P)

    vmem_limit = int(min(max(2 * _vmem_estimate(TQ, P, 2), 16 * 1024 * 1024), vmem_cap))
    grid = (P // TQ,)

    def _make_call(single_buffer_constants):
        const_kw = ({"pipeline_mode": pl.Buffered(1)}
                    if single_buffer_constants else {})
        return pl.pallas_call(
            ultimus_kernel,
            out_shape=jax.ShapeDtypeStruct((D_IN, P), jnp.float32),
            grid=grid,
            in_specs=[
                pl.BlockSpec((TQ, 3 * D_K), lambda i: (i, 0)),              # q-row tile of kqv
                pl.BlockSpec((P, 3 * D_K), lambda i: (0, 0), **const_kw),   # resident kqv (k/v)
                pl.BlockSpec((1, P), lambda i: (0, 0), **const_kw),         # additive key mask
                pl.BlockSpec((D_IN, D_K), lambda i: (0, 0), **const_kw),    # Wout
                pl.BlockSpec((D_IN, 1), lambda i: (0, 0), **const_kw),      # bout
            ],
            out_specs=pl.BlockSpec((D_IN, TQ), lambda i: (0, i)),           # lane-dense out^T
            compiler_params=pltpu.CompilerParams(
                dimension_semantics=("parallel",),
                vmem_limit_bytes=vmem_limit,
            ),
        )

    try:
        out_t = _make_call(True)(kqv, kqv, mask, wo, bo)
    except Exception:
        # Older jax without per-BlockSpec pipeline_mode / Buffered(1): default buffering.
        out_t = _make_call(False)(kqv, kqv, mask, wo, bo)

    return out_t[:, :B].T


def ultimus_reference(x, params):
    """Plain-JAX reference matching the PyTorch forward exactly."""
    k = x @ params["wk"].T + params["bk"]
    q = x @ params["wq"].T + params["bq"]
    v = x @ params["wv"].T + params["bv"]
    logits = (q @ k.T) / jnp.sqrt(jnp.float32(D_K))
    score = jax.nn.softmax(logits, axis=1)
    attn = score @ v
    return attn @ params["wo"].T + params["bo"]


def init_params(key):
    """Deterministic init mimicking nn.Linear's U(-1/sqrt(fan_in), 1/sqrt(fan_in))."""
    ks = jax.random.split(key, 8)

    def lin(kw, kb, fan_out, fan_in):
        bound = 1.0 / math.sqrt(fan_in)
        w = jax.random.uniform(kw, (fan_out, fan_in), jnp.float32, -bound, bound)
        b = jax.random.uniform(kb, (fan_out,), jnp.float32, -bound, bound)
        return w, b

    wk, bk = lin(ks[0], ks[1], D_K, D_IN)
    wq, bq = lin(ks[2], ks[3], D_K, D_IN)
    wv, bv = lin(ks[4], ks[5], D_K, D_IN)
    wo, bo = lin(ks[6], ks[7], D_IN, D_K)
    return dict(wk=wk, bk=bk, wq=wq, bq=bq, wv=wv, bv=bv, wo=wo, bo=bo)


if __name__ == "__main__":
    key = jax.random.PRNGKey(0)
    k_param, k_x = jax.random.split(key)
    params = init_params(k_param)

    B = 16
    x = jax.random.normal(k_x, (B, D_IN), dtype=jnp.float32)

    out = ultimus_forward(x, params)
    out = jax.block_until_ready(out)

    ref = ultimus_reference(x, params)
    assert out.shape == (B, D_IN)
    # Tolerance slightly above pure-f32: scale folded into Wq and EUP reciprocal
    # (Newton-refined) reassociate a couple of ops.
    assert jnp.allclose(out, ref, atol=1e-4, rtol=1e-4), "mismatch vs reference"
    print("KERNEL_OK")
</pallas_src>

<mosaic_0001>
module attributes {stable_mosaic.version = 11 : i64} {
  func.func @ultimus_kernel(%arg0: i32, %arg1: memref<128x24xf32, #tpu.memory_space<vmem>>, %arg2: memref<128x24xf32, #tpu.memory_space<vmem>>, %arg3: memref<1x128xf32, #tpu.memory_space<vmem>>, %arg4: memref<48x8xf32, #tpu.memory_space<vmem>>, %arg5: memref<48x1xf32, #tpu.memory_space<vmem>>, %arg6: memref<48x128xf32, #tpu.memory_space<vmem>>) attributes {dimension_semantics = [#tpu.dimension_semantics<parallel>], iteration_bounds = array<i64: 1>, scalar_prefetch = 0 : i64, scratch_operands = 0 : i64, tpu.core_type = #tpu.core_type<tc>, window_params = [{transform_indices = @transform_0, window_bounds = array<i64: 128, 24>}, {pipeline_mode = #tpu.pipeline_mode<synchronous>, transform_indices = @transform_1, window_bounds = array<i64: 128, 24>}, {pipeline_mode = #tpu.pipeline_mode<synchronous>, transform_indices = @transform_2, window_bounds = array<i64: 1, 128>}, {pipeline_mode = #tpu.pipeline_mode<synchronous>, transform_indices = @transform_3, window_bounds = array<i64: 48, 8>}, {pipeline_mode = #tpu.pipeline_mode<synchronous>, transform_indices = @transform_4, window_bounds = array<i64: 48, 1>}, {transform_indices = @transform_5, window_bounds = array<i64: 48, 128>}]} {
    %c0 = arith.constant 0 : index
    %c0_0 = arith.constant 0 : index
    %0 = vector.load %arg2[%c0, %c0_0] : memref<128x24xf32, #tpu.memory_space<vmem>>, vector<128x24xf32>
    %1 = vector.extract_strided_slice %0 {offsets = [0, 0], sizes = [128, 8], strides = [1, 1]} : vector<128x24xf32> to vector<128x8xf32>
    %2 = vector.extract_strided_slice %0 {offsets = [0, 16], sizes = [128, 8], strides = [1, 1]} : vector<128x24xf32> to vector<128x8xf32>
    %c0_1 = arith.constant 0 : index
    %c0_2 = arith.constant 0 : index
    %3 = vector.load %arg1[%c0_1, %c0_2] : memref<128x24xf32, #tpu.memory_space<vmem>>, vector<128x24xf32>
    %4 = vector.extract_strided_slice %3 {offsets = [0, 8], sizes = [128, 8], strides = [1, 1]} : vector<128x24xf32> to vector<128x8xf32>
    %cst = arith.constant dense<0.000000e+00> : vector<128x128xf32>
    %5 = tpu.matmul %4, %1, %cst {dimension_numbers = #tpu.dot_dimension_numbers<[1], [1], [0], [0], [0, 0, 1, 0], [], []>} : vector<128x8xf32>, vector<128x8xf32>, vector<128x128xf32> -> vector<128x128xf32>
    %c0_3 = arith.constant 0 : index
    %c0_4 = arith.constant 0 : index
    %6 = vector.load %arg3[%c0_3, %c0_4] : memref<1x128xf32, #tpu.memory_space<vmem>>, vector<1x128xf32>
    %7 = vector.broadcast %6 : vector<1x128xf32> to vector<128x128xf32>
    %8 = arith.addf %5, %7 : vector<128x128xf32>
    %cst_5 = arith.constant dense<0xFF800000> : vector<128xf32>
    %9 = vector.multi_reduction <maximumf>, %8, %cst_5 [1] : vector<128x128xf32> to vector<128xf32>
    %10 = vector.shape_cast %9 : vector<128xf32> to vector<128x1xf32>
    %11 = vector.broadcast %10 : vector<128x1xf32> to vector<128x128xf32>
    %12 = arith.subf %8, %11 : vector<128x128xf32>
    %13 = math.exp %12 : vector<128x128xf32>
    %cst_6 = arith.constant dense<0.000000e+00> : vector<128xf32>
    %14 = vector.multi_reduction <add>, %13, %cst_6 [1] : vector<128x128xf32> to vector<128xf32>
    %15 = vector.shape_cast %14 : vector<128xf32> to vector<128x1xf32>
    %16 = tpu.reciprocal %15 {approx = true} : vector<128x1xf32> -> vector<128x1xf32>
    %17 = arith.mulf %15, %16 : vector<128x1xf32>
    %cst_7 = arith.constant 2.000000e+00 : f32
    %18 = vector.broadcast %cst_7 : f32 to vector<128x1xf32>
    %19 = arith.subf %18, %17 : vector<128x1xf32>
    %20 = arith.mulf %16, %19 : vector<128x1xf32>
    %21 = vector.broadcast %20 : vector<128x1xf32> to vector<128x128xf32>
    %22 = arith.mulf %13, %21 : vector<128x128xf32>
    %cst_8 = arith.constant dense<0.000000e+00> : vector<128x8xf32>
    %23 = tpu.matmul %22, %2, %cst_8 {dimension_numbers = #tpu.dot_dimension_numbers<[1], [0], [0], [1], [0, 0, 1, 1], [], []>} : vector<128x128xf32>, vector<128x8xf32>, vector<128x8xf32> -> vector<128x8xf32>
    %c0_9 = arith.constant 0 : index
    %c0_10 = arith.constant 0 : index
    %24 = vector.load %arg4[%c0_9, %c0_10] : memref<48x8xf32, #tpu.memory_space<vmem>>, vector<48x8xf32>
    %cst_11 = arith.constant dense<0.000000e+00> : vector<48x128xf32>
    %25 = tpu.matmul %24, %23, %cst_11 {dimension_numbers = #tpu.dot_dimension_numbers<[1], [1], [0], [0], [0, 0, 1, 0], [], []>} : vector<48x8xf32>, vector<128x8xf32>, vector<48x128xf32> -> vector<48x128xf32>
    %c0_12 = arith.constant 0 : index
    %c0_13 = arith.constant 0 : index
    %26 = vector.load %arg5[%c0_12, %c0_13] : memref<48x1xf32, #tpu.memory_space<vmem>>, vector<48x1xf32>
    %27 = vector.broadcast %26 : vector<48x1xf32> to vector<48x128xf32>
    %28 = arith.addf %25, %27 : vector<48x128xf32>
    %c0_14 = arith.constant 0 : index
    %c0_15 = arith.constant 0 : index
    %29 = vector.load %arg6[%c0_14, %c0_15] : memref<48x128xf32, #tpu.memory_space<vmem>>, vector<48x128xf32>
    tpu.vector_store %arg6[%c0_14, %c0_15], %28 {strides = array<i32>} : memref<48x128xf32, #tpu.memory_space<vmem>>, vector<48x128xf32>,
    return
  }
  func.func @transform_0(%arg0: i32) -> (i32, i32) {
    %c0_i32 = arith.constant 0 : i32
    %c0_i32_0 = arith.constant 0 : i32
    return %arg0, %c0_i32 : i32, i32
  }
  func.func @transform_1(%arg0: i32) -> (i32, i32) {
    %c0_i32 = arith.constant 0 : i32
    %c0_i32_0 = arith.constant 0 : i32
    %c0_i32_1 = arith.constant 0 : i32
    return %c0_i32, %c0_i32_0 : i32, i32
  }
  func.func @transform_2(%arg0: i32) -> (i32, i32) {
    %c0_i32 = arith.constant 0 : i32
    %c0_i32_0 = arith.constant 0 : i32
    %c0_i32_1 = arith.constant 0 : i32
    return %c0_i32, %c0_i32_0 : i32, i32
  }
  func.func @transform_3(%arg0: i32) -> (i32, i32) {
    %c0_i32 = arith.constant 0 : i32
    %c0_i32_0 = arith.constant 0 : i32
    %c0_i32_1 = arith.constant 0 : i32
    return %c0_i32, %c0_i32_0 : i32, i32
  }
  func.func @transform_4(%arg0: i32) -> (i32, i32) {
    %c0_i32 = arith.constant 0 : i32
    %c0_i32_0 = arith.constant 0 : i32
    %c0_i32_1 = arith.constant 0 : i32
    return %c0_i32, %c0_i32_0 : i32, i32
  }
  func.func @transform_5(%arg0: i32) -> (i32, i32) {
    %c0_i32 = arith.constant 0 : i32
    %c0_i32_0 = arith.constant 0 : i32
    return %c0_i32, %arg0 : i32, i32
  }
}

module attributes {stable_mosaic.version = 11 : i64} {
  func.func @ultimus_kernel(%arg0: i32, %arg1: memref<128x24xf32, #tpu.memory_space<vmem>>, %arg2: memref<128x24xf32, #tpu.memory_space<vmem>>, %arg3: memref<1x128xf32, #tpu.memory_space<vmem>>, %arg4: memref<48x8xf32, #tpu.memory_space<vmem>>, %arg5: memref<48x1xf32, #tpu.memory_space<vmem>>, %arg6: memref<48x128xf32, #tpu.memory_space<vmem>>) attributes {dimension_semantics = [#tpu.dimension_semantics<parallel>], iteration_bounds = array<i64: 1>, scalar_prefetch = 0 : i64, scratch_operands = 0 : i64, tpu.core_type = #tpu.core_type<tc>, window_params = [{transform_indices = @transform_0, window_bounds = array<i64: 128, 24>}, {pipeline_mode = #tpu.pipeline_mode<synchronous>, transform_indices = @transform_1, window_bounds = array<i64: 128, 24>}, {pipeline_mode = #tpu.pipeline_mode<synchronous>, transform_indices = @transform_2, window_bounds = array<i64: 1, 128>}, {pipeline_mode = #tpu.pipeline_mode<synchronous>, transform_indices = @transform_3, window_bounds = array<i64: 48, 8>}, {pipeline_mode = #tpu.pipeline_mode<synchronous>, transform_indices = @transform_4, window_bounds = array<i64: 48, 1>}, {transform_indices = @transform_5, window_bounds = array<i64: 48, 128>}]} {
    %c0 = arith.constant 0 : index
    %c0_0 = arith.constant 0 : index
    %0 = vector.load %arg2[%c0, %c0_0] : memref<128x24xf32, #tpu.memory_space<vmem>>, vector<128x24xf32>
    %1 = vector.extract_strided_slice %0 {offsets = [0, 0], sizes = [128, 8], strides = [1, 1]} : vector<128x24xf32> to vector<128x8xf32>
    %2 = vector.extract_strided_slice %0 {offsets = [0, 16], sizes = [128, 8], strides = [1, 1]} : vector<128x24xf32> to vector<128x8xf32>
    %c0_1 = arith.constant 0 : index
    %c0_2 = arith.constant 0 : index
    %3 = vector.load %arg1[%c0_1, %c0_2] : memref<128x24xf32, #tpu.memory_space<vmem>>, vector<128x24xf32>
    %4 = vector.extract_strided_slice %3 {offsets = [0, 8], sizes = [128, 8], strides = [1, 1]} : vector<128x24xf32> to vector<128x8xf32>
    %cst = arith.constant dense<0.000000e+00> : vector<128x128xf32>
    %5 = tpu.matmul %4, %1, %cst {dimension_numbers = #tpu.dot_dimension_numbers<[1], [1], [0], [0], [0, 0, 1, 0], [], []>} : vector<128x8xf32>, vector<128x8xf32>, vector<128x128xf32> -> vector<128x128xf32>
    %c0_3 = arith.constant 0 : index
    %c0_4 = arith.constant 0 : index
    %6 = vector.load %arg3[%c0_3, %c0_4] : memref<1x128xf32, #tpu.memory_space<vmem>>, vector<1x128xf32>
    %7 = vector.broadcast %6 : vector<1x128xf32> to vector<128x128xf32>
    %8 = arith.addf %5, %7 : vector<128x128xf32>
    %cst_5 = arith.constant dense<0xFF800000> : vector<128xf32>
    %9 = vector.multi_reduction <maximumf>, %8, %cst_5 [1] : vector<128x128xf32> to vector<128xf32>
    %10 = vector.shape_cast %9 : vector<128xf32> to vector<128x1xf32>
    %11 = vector.broadcast %10 : vector<128x1xf32> to vector<128x128xf32>
    %12 = arith.subf %8, %11 : vector<128x128xf32>
    %13 = math.exp %12 : vector<128x128xf32>
    %cst_6 = arith.constant dense<0.000000e+00> : vector<128xf32>
    %14 = vector.multi_reduction <add>, %13, %cst_6 [1] : vector<128x128xf32> to vector<128xf32>
    %15 = vector.shape_cast %14 : vector<128xf32> to vector<128x1xf32>
    %16 = tpu.reciprocal %15 {approx = true} : vector<128x1xf32> -> vector<128x1xf32>
    %17 = arith.mulf %15, %16 : vector<128x1xf32>
    %cst_7 = arith.constant 2.000000e+00 : f32
    %18 = vector.broadcast %cst_7 : f32 to vector<128x1xf32>
    %19 = arith.subf %18, %17 : vector<128x1xf32>
    %20 = arith.mulf %16, %19 : vector<128x1xf32>
    %21 = vector.broadcast %20 : vector<128x1xf32> to vector<128x128xf32>
    %22 = arith.mulf %13, %21 : vector<128x128xf32>
    %cst_8 = arith.constant dense<0.000000e+00> : vector<128x8xf32>
    %23 = tpu.matmul %22, %2, %cst_8 {dimension_numbers = #tpu.dot_dimension_numbers<[1], [0], [0], [1], [0, 0, 1, 1], [], []>} : vector<128x128xf32>, vector<128x8xf32>, vector<128x8xf32> -> vector<128x8xf32>
    %c0_9 = arith.constant 0 : index
    %c0_10 = arith.constant 0 : index
    %24 = vector.load %arg4[%c0_9, %c0_10] : memref<48x8xf32, #tpu.memory_space<vmem>>, vector<48x8xf32>
    %cst_11 = arith.constant dense<0.000000e+00> : vector<48x128xf32>
    %25 = tpu.matmul %24, %23, %cst_11 {dimension_numbers = #tpu.dot_dimension_numbers<[1], [1], [0], [0], [0, 0, 1, 0], [], []>} : vector<48x8xf32>, vector<128x8xf32>, vector<48x128xf32> -> vector<48x128xf32>
    %c0_12 = arith.constant 0 : index
    %c0_13 = arith.constant 0 : index
    %26 = vector.load %arg5[%c0_12, %c0_13] : memref<48x1xf32, #tpu.memory_space<vmem>>, vector<48x1xf32>
    %27 = vector.broadcast %26 : vector<48x1xf32> to vector<48x128xf32>
    %28 = arith.addf %25, %27 : vector<48x128xf32>
    %c0_14 = arith.constant 0 : index
    %c0_15 = arith.constant 0 : index
    %29 = vector.load %arg6[%c0_14, %c0_15] : memref<48x128xf32, #tpu.memory_space<vmem>>, vector<48x128xf32>
    tpu.vector_store %arg6[%c0_14, %c0_15], %28 {strides = array<i32>} : memref<48x128xf32, #tpu.memory_space<vmem>>, vector<48x128xf32>,
    return
  }
  func.func @transform_0(%arg0: i32) -> (i32, i32) {
    %c0_i32 = arith.constant 0 : i32
    %c0_i32_0 = arith.constant 0 : i32
    return %arg0, %c0_i32 : i32, i32
  }
  func.func @transform_1(%arg0: i32) -> (i32, i32) {
    %c0_i32 = arith.constant 0 : i32
    %c0_i32_0 = arith.constant 0 : i32
    %c0_i32_1 = arith.constant 0 : i32
    return %c0_i32, %c0_i32_0 : i32, i32
  }
  func.func @transform_2(%arg0: i32) -> (i32, i32) {
    %c0_i32 = arith.constant 0 : i32
    %c0_i32_0 = arith.constant 0 : i32
    %c0_i32_1 = arith.constant 0 : i32
    return %c0_i32, %c0_i32_0 : i32, i32
  }
  func.func @transform_3(%arg0: i32) -> (i32, i32) {
    %c0_i32 = arith.constant 0 : i32
    %c0_i32_0 = arith.constant 0 : i32
    %c0_i32_1 = arith.constant 0 : i32
    return %c0_i32, %c0_i32_0 : i32, i32
  }
  func.func @transform_4(%arg0: i32) -> (i32, i32) {
    %c0_i32 = arith.constant 0 : i32
    %c0_i32_0 = arith.constant 0 : i32
    %c0_i32_1 = arith.constant 0 : i32
    return %c0_i32, %c0_i32_0 : i32, i32
  }
  func.func @transform_5(%arg0: i32) -> (i32, i32) {
    %c0_i32 = arith.constant 0 : i32
    %c0_i32_0 = arith.constant 0 : i32
    return %c0_i32, %arg0 : i32, i32
  }
}

</mosaic_0001>

<llo_original>
// kernel: tpu_custom_call.1
$region0: #{tpu_custom_call.1}
  #allocation0 [shape = 'u32[]', space=smem, size = 0x4, offset = 0x4, fixed_abs, tag = 'smem constant byte address 0x4 - core index']
  #allocation1 [shape = 'u32[144,128]{1,0:T(1,128)}', space=vmem, size = 0x12000, scoped, tag = 'internal scratch']
  %s0 = inlined_call_operand.vmem [shape: f32[128,24], index: 0, kind: input, shape index: {}]
  %s1 = inlined_call_operand.vmem [shape: f32[128,24], index: 1, kind: input, shape index: {}]
  %s2 = inlined_call_operand.vmem [shape: f32[1,128], index: 2, kind: input, shape index: {}]
  %s3 = inlined_call_operand.vmem [shape: f32[48,8], index: 3, kind: input, shape index: {}]
  %s4 = inlined_call_operand.vmem [shape: f32[48,1], index: 4, kind: input, shape index: {}]
  %s5 = inlined_call_operand.hbm [shape: f32[48,128], index: 5, kind: output, shape index: {}]
  %s6 = sld [smem:[#allocation0]]
  $region30: #{tpu_custom_call.1} parent=0
    _
  %s8 = ssub.s32 1, %s6
  %s9 = scalar_select 0, %s8, %s6
  $region1: #{tpu_custom_call.1} parent=0
    #allocation2 [shape = 'u8[24576]{0}', space=vmem, size = 0x6000, scoped, tag = 'output window, operand 0, single buffered']
    #allocation3 [shape = 's32[1]{0}', space=sflag, size = 0x4, scoped, tag = 'scoped memory for tpu_custom_call.1']
    %10 = vsyncpa [#allocation3], 0
    // Predicated region
    $region2: #{tpu_custom_call.1} parent=1 // pred_check
      _
    $region3: #{tpu_custom_call.1} parent=1 // pred_check_branch
      %12 = sbr.rel (0) target = $region5
    $region4: #{tpu_custom_call.1} parent=1 // pred_region
      _
    $region5: #{tpu_custom_call.1} parent=1 // pred_fallthru
      _
    // Predicated region
    $region6: #{tpu_custom_call.1} parent=1 // pred_check
      _
    $region7: #{tpu_custom_call.1} parent=1 // pred_check_branch
      %14 = sbr.rel (0) target = $region9
    $region8: #{tpu_custom_call.1} parent=1 // pred_region
      _
    $region9: #{tpu_custom_call.1} parent=1 // pred_fallthru
      _
    // Predicated region
    $region10: #{tpu_custom_call.1} parent=1 // pred_check
      _
    $region11: #{tpu_custom_call.1} parent=1 // pred_check_branch
      %16 = sbr.rel (0) target = $region13
    $region12: #{tpu_custom_call.1} parent=1 // pred_region
      _
    $region13: #{tpu_custom_call.1} parent=1 // pred_fallthru
      _
    // Predicated region
    $region14: #{tpu_custom_call.1} parent=1 // pred_check
      _
    $region15: #{tpu_custom_call.1} parent=1 // pred_check_branch
      %18 = sbr.rel (0) target = $region17
    $region16: #{tpu_custom_call.1} parent=1 // pred_region
      _
    $region17: #{tpu_custom_call.1} parent=1 // pred_fallthru
      _
    // Predicated region
    $region18: #{tpu_custom_call.1} parent=1 // pred_check
      _
    $region19: #{tpu_custom_call.1} parent=1 // pred_check_branch
      %20 = sbr.rel (0) target = $region21
    $region20: #{tpu_custom_call.1} parent=1 // pred_region
      _
    $region21: #{tpu_custom_call.1} parent=1 // pred_fallthru
      _
    %v21 = vld [vmem:[%s1] sm:$0xff]
    %v22 = vld [vmem:[%s1 + $0x8] sm:$0xff]
    %v23 = vld [vmem:[%s1 + $0x10] sm:$0xff]
    %v24 = vld [vmem:[%s1 + $0x18] sm:$0xff]
    %v25 = vld [vmem:[%s1 + $0x20] sm:$0xff]
    %v26 = vld [vmem:[%s1 + $0x28] sm:$0xff]
    %v27 = vld [vmem:[%s1 + $0x30] sm:$0xff]
    %v28 = vld [vmem:[%s1 + $0x38] sm:$0xff]
    %v29 = vld [vmem:[%s1 + $0x40] sm:$0xff]
    %v30 = vld [vmem:[%s1 + $0x48] sm:$0xff]
    %v31 = vld [vmem:[%s1 + $0x50] sm:$0xff]
    %v32 = vld [vmem:[%s1 + $0x58] sm:$0xff]
    %v33 = vld [vmem:[%s1 + $0x60] sm:$0xff]
    %v34 = vld [vmem:[%s1 + $0x68] sm:$0xff]
    %v35 = vld [vmem:[%s1 + $0x70] sm:$0xff]
    %v36 = vld [vmem:[%s1 + $0x78] sm:$0xff]
    %v37 = vld [vmem:[%s0] sm:$0xff]
    %v38 = vld [vmem:[%s0 + $0x8] sm:$0xff]
    %v39 = vld [vmem:[%s0 + $0x10] sm:$0xff]
    %v40 = vld [vmem:[%s0 + $0x18] sm:$0xff]
    %v41 = vld [vmem:[%s0 + $0x20] sm:$0xff]
    %v42 = vld [vmem:[%s0 + $0x28] sm:$0xff]
    %v43 = vld [vmem:[%s0 + $0x30] sm:$0xff]
    %v44 = vld [vmem:[%s0 + $0x38] sm:$0xff]
    %v45 = vld [vmem:[%s0 + $0x40] sm:$0xff]
    %v46 = vld [vmem:[%s0 + $0x48] sm:$0xff]
    %v47 = vld [vmem:[%s0 + $0x50] sm:$0xff]
    %v48 = vld [vmem:[%s0 + $0x58] sm:$0xff]
    %v49 = vld [vmem:[%s0 + $0x60] sm:$0xff]
    %v50 = vld [vmem:[%s0 + $0x68] sm:$0xff]
    %v51 = vld [vmem:[%s0 + $0x70] sm:$0xff]
    %v52 = vld [vmem:[%s0 + $0x78] sm:$0xff]
    %v53 = vld [vmem:[%s2] sm:$0x1]
    %v55 = vlaneseq
    %v56 = vshrl.u32 %v55, 7
    %v57 = vsub.s32 0, %v56
    %v58 = vrot.slane %v53, %v57
    %76 = vrot.lane.b32.xlu0 %v37, 120
    %v77 = vpop.permute.xlu0 %76
    %78 = vrot.lane.b32.xlu0 %v38, 120
    %v79 = vpop.permute.xlu0 %78
    %80 = vrot.lane.b32.xlu0 %v39, 120
    %v81 = vpop.permute.xlu0 %80
    %82 = vrot.lane.b32.xlu0 %v40, 120
    %v83 = vpop.permute.xlu0 %82
    %84 = vrot.lane.b32.xlu0 %v41, 120
    %v85 = vpop.permute.xlu0 %84
    %86 = vrot.lane.b32.xlu0 %v42, 120
    %v87 = vpop.permute.xlu0 %86
    %88 = vrot.lane.b32.xlu0 %v43, 120
    %v89 = vpop.permute.xlu0 %88
    %90 = vrot.lane.b32.xlu0 %v44, 120
    %v91 = vpop.permute.xlu0 %90
    %92 = vrot.lane.b32.xlu0 %v45, 120
    %v93 = vpop.permute.xlu0 %92
    %94 = vrot.lane.b32.xlu0 %v46, 120
    %v95 = vpop.permute.xlu0 %94
    %96 = vrot.lane.b32.xlu0 %v47, 120
    %v97 = vpop.permute.xlu0 %96
    %98 = vrot.lane.b32.xlu0 %v48, 120
    %v99 = vpop.permute.xlu0 %98
    %100 = vrot.lane.b32.xlu0 %v49, 120
    %v101 = vpop.permute.xlu0 %100
    %102 = vrot.lane.b32.xlu0 %v50, 120
    %v103 = vpop.permute.xlu0 %102
    %104 = vrot.lane.b32.xlu0 %v51, 120
    %v105 = vpop.permute.xlu0 %104
    %106 = vrot.lane.b32.xlu0 %v52, 120
    %v107 = vpop.permute.xlu0 %106
    %vm108 = vcmask 64512
    %v109 = vsel %vm108, %v77, 0
    %v111 = vsel %vm108, %v79, 0
    %v113 = vsel %vm108, %v81, 0
    %v115 = vsel %vm108, %v83, 0
    %v117 = vsel %vm108, %v85, 0
    %v119 = vsel %vm108, %v87, 0
    %v121 = vsel %vm108, %v89, 0
    %v123 = vsel %vm108, %v91, 0
    %v125 = vsel %vm108, %v93, 0
    %v127 = vsel %vm108, %v95, 0
    %v129 = vsel %vm108, %v97, 0
    %v131 = vsel %vm108, %v99, 0
    %v133 = vsel %vm108, %v101, 0
    %v135 = vsel %vm108, %v103, 0
    %v137 = vsel %vm108, %v105, 0
    %v139 = vsel %vm108, %v107, 0
    %v142 = vsel %vm108, %v21, 0
    %v145 = vsel %vm108, %v22, 0
    %v148 = vsel %vm108, %v23, 0
    %v151 = vsel %vm108, %v24, 0
    %v154 = vsel %vm108, %v25, 0
    %v157 = vsel %vm108, %v26, 0
    %v160 = vsel %vm108, %v27, 0
    %v163 = vsel %vm108, %v28, 0
    %v166 = vsel %vm108, %v29, 0
    %v169 = vsel %vm108, %v30, 0
    %v172 = vsel %vm108, %v31, 0
    %v175 = vsel %vm108, %v32, 0
    %v178 = vsel %vm108, %v33, 0
    %v181 = vsel %vm108, %v34, 0
    %v184 = vsel %vm108, %v35, 0
    %v187 = vsel %vm108, %v36, 0
    %189 = vmatprep.subr.mxu0 0.0
    %190 = vmatpush1.xpose.msra.mxu0 %v142
    %191 = vmatprep.subr.mxu0 0.0
    %192 = vmatpush1.xpose.msra.mxu0 %v145
    %193 = vmatprep.subr.mxu0 0.0
    %194 = vmatpush1.xpose.msra.mxu0 %v148
    %195 = vmatprep.subr.mxu0 0.0
    %196 = vmatpush1.xpose.msra.mxu0 %v151
    %197 = vmatprep.subr.mxu0 0.0
    %198 = vmatpush1.xpose.msra.mxu0 %v154
    %199 = vmatprep.subr.mxu0 0.0
    %200 = vmatpush1.xpose.msra.mxu0 %v157
    %201 = vmatprep.subr.mxu0 0.0
    %202 = vmatpush1.xpose.msra.mxu0 %v160
    %203 = vmatprep.subr.mxu0 0.0
    %204 = vmatpush1.xpose.msra.mxu0 %v163
    %205 = vmatprep.subr.mxu0 0.0
    %206 = vmatpush1.xpose.msra.mxu0 %v166
    %207 = vmatprep.subr.mxu0 0.0
    %208 = vmatpush1.xpose.msra.mxu0 %v169
    %209 = vmatprep.subr.mxu0 0.0
    %210 = vmatpush1.xpose.msra.mxu0 %v172
    %211 = vmatprep.subr.mxu0 0.0
    %212 = vmatpush1.xpose.msra.mxu0 %v175
    %213 = vmatprep.subr.mxu0 0.0
    %214 = vmatpush1.xpose.msra.mxu0 %v178
    %215 = vmatprep.subr.mxu0 0.0
    %216 = vmatpush1.xpose.msra.mxu0 %v181
    %217 = vmatprep.subr.mxu0 0.0
    %218 = vmatpush1.xpose.msra.mxu0 %v184
    %219 = vmatprep.subr.mxu0 0.0
    %220 = vmatpush1.xpose.msra.mxu0 %v187
    %221 = vmatprep.subr.mxu0 0.0
    %222 = vmatpush1.xpose.msra.mxu0 0.0
    %223 = vmatprep.subr.mxu0 0.0
    %224 = vmatpush1.xpose.msra.mxu0 0.0
    %225 = vmatprep.subr.mxu0 0.0
    %226 = vmatpush1.xpose.msra.mxu0 0.0
    %227 = vmatprep.subr.mxu0 0.0
    %228 = vmatpush1.xpose.msra.mxu0 0.0
    %229 = vmatprep.subr.mxu0 0.0
    %230 = vmatpush1.xpose.msra.mxu0 0.0
    %231 = vmatprep.subr.mxu0 0.0
    %232 = vmatpush1.xpose.msra.mxu0 0.0
    %233 = vmatprep.subr.mxu0 0.0
    %234 = vmatpush1.xpose.msra.mxu0 0.0
    %235 = vmatprep.subr.mxu0 0.0
    %236 = vmatpush1.xpose.msra.mxu0 0.0
    %237 = vmatprep.subr.mxu0 0.0
    %238 = vmatpush1.xpose.msra.mxu0 0.0
    %239 = vmatprep.subr.mxu0 0.0
    %240 = vmatpush1.xpose.msra.mxu0 0.0
    %241 = vmatprep.subr.mxu0 0.0
    %242 = vmatpush1.xpose.msra.mxu0 0.0
    %243 = vmatprep.subr.mxu0 0.0
    %244 = vmatpush1.xpose.msra.mxu0 0.0
    %245 = vmatprep.subr.mxu0 0.0
    %246 = vmatpush1.xpose.msra.mxu0 0.0
    %247 = vmatprep.subr.mxu0 0.0
    %248 = vmatpush1.xpose.msra.mxu0 0.0
    %249 = vmatprep.subr.mxu0 0.0
    %250 = vmatpush1.xpose.msra.mxu0 0.0
    %251 = vmatprep.subr.mxu0 0.0
    %252 = vmatpush1.xpose.msra.mxu0 0.0
    %253 = vmatprep.mubr.f32.mxu0 0.0
    %254 = vmatmul.mubr.f32.gmra.mrb[0].mxu0 %v109
    %v255 = vpop.f32.mrb[0].mxu0
    %v256 = vadd.f32 %v58, %v255
    %v257 = vpop.f32.mrb[0].mxu0
    %258 = vmatprep.mubr.f32.mxu0 0.0
    %259 = vmatmul.mubr.f32.gmra.mrb[0].mxu0 %v111
    %v260 = vpop.f32.mrb[0].mxu0
    %v261 = vadd.f32 %v58, %v260
    %v262 = vpop.f32.mrb[0].mxu0
    %263 = vmatprep.mubr.f32.mxu0 0.0
    %264 = vmatmul.mubr.f32.gmra.mrb[0].mxu0 %v113
    %v265 = vpop.f32.mrb[0].mxu0
    %v266 = vadd.f32 %v58, %v265
    %v267 = vpop.f32.mrb[0].mxu0
    %268 = vmatprep.mubr.f32.mxu0 0.0
    %269 = vmatmul.mubr.f32.gmra.mrb[0].mxu0 %v115
    %v270 = vpop.f32.mrb[0].mxu0
    %v271 = vadd.f32 %v58, %v270
    %v272 = vpop.f32.mrb[0].mxu0
    %273 = vmatprep.mubr.f32.mxu0 0.0
    %274 = vmatmul.mubr.f32.gmra.mrb[0].mxu0 %v117
    %v275 = vpop.f32.mrb[0].mxu0
    %v276 = vadd.f32 %v58, %v275
    %v277 = vpop.f32.mrb[0].mxu0
    %278 = vmatprep.mubr.f32.mxu0 0.0
    %279 = vmatmul.mubr.f32.gmra.mrb[0].mxu0 %v119
    %v280 = vpop.f32.mrb[0].mxu0
    %v281 = vadd.f32 %v58, %v280
    %v282 = vpop.f32.mrb[0].mxu0
    %283 = vmatprep.mubr.f32.mxu0 0.0
    %284 = vmatmul.mubr.f32.gmra.mrb[0].mxu0 %v121
    %v285 = vpop.f32.mrb[0].mxu0
    %v286 = vadd.f32 %v58, %v285
    %v287 = vpop.f32.mrb[0].mxu0
    %288 = vmatprep.mubr.f32.mxu0 0.0
    %289 = vmatmul.mubr.f32.gmra.mrb[0].mxu0 %v123
    %v290 = vpop.f32.mrb[0].mxu0
    %v291 = vadd.f32 %v58, %v290
    %v292 = vpop.f32.mrb[0].mxu0
    %293 = vmatprep.mubr.f32.mxu0 0.0
    %294 = vmatmul.mubr.f32.gmra.mrb[0].mxu0 %v125
    %v295 = vpop.f32.mrb[0].mxu0
    %v296 = vadd.f32 %v58, %v295
    %v297 = vpop.f32.mrb[0].mxu0
    %298 = vmatprep.mubr.f32.mxu0 0.0
    %299 = vmatmul.mubr.f32.gmra.mrb[0].mxu0 %v127
    %v300 = vpop.f32.mrb[0].mxu0
    %v301 = vadd.f32 %v58, %v300
    %v302 = vpop.f32.mrb[0].mxu0
    %303 = vmatprep.mubr.f32.mxu0 0.0
    %304 = vmatmul.mubr.f32.gmra.mrb[0].mxu0 %v129
    %v305 = vpop.f32.mrb[0].mxu0
    %v306 = vadd.f32 %v58, %v305
    %v307 = vpop.f32.mrb[0].mxu0
    %308 = vmatprep.mubr.f32.mxu0 0.0
    %309 = vmatmul.mubr.f32.gmra.mrb[0].mxu0 %v131
    %v310 = vpop.f32.mrb[0].mxu0
    %v311 = vadd.f32 %v58, %v310
    %v312 = vpop.f32.mrb[0].mxu0
    %313 = vmatprep.mubr.f32.mxu0 0.0
    %314 = vmatmul.mubr.f32.gmra.mrb[0].mxu0 %v133
    %v315 = vpop.f32.mrb[0].mxu0
    %v316 = vadd.f32 %v58, %v315
    %v317 = vpop.f32.mrb[0].mxu0
    %318 = vmatprep.mubr.f32.mxu0 0.0
    %319 = vmatmul.mubr.f32.gmra.mrb[0].mxu0 %v135
    %v320 = vpop.f32.mrb[0].mxu0
    %v321 = vadd.f32 %v58, %v320
    %v322 = vpop.f32.mrb[0].mxu0
    %323 = vmatprep.mubr.f32.mxu0 0.0
    %324 = vmatmul.mubr.f32.gmra.mrb[0].mxu0 %v137
    %v325 = vpop.f32.mrb[0].mxu0
    %v326 = vadd.f32 %v58, %v325
    %v327 = vpop.f32.mrb[0].mxu0
    %328 = vmatprep.mubr.f32.mxu0 0.0
    %329 = vmatmul.mubr.f32.gmra.mrb[0].mxu0 %v139
    %v330 = vpop.f32.mrb[0].mxu0
    %v331 = vadd.f32 %v58, %v330
    %v332 = vpop.f32.mrb[0].mxu0
    %333 = vdwg.mxu0
    %334 = vmax.xlane.f32.xlu0 %v256
    %v335 = vpop.xlane.xlu0 %334
    %336 = vmax.xlane.f32.xlu0 %v261
    %v337 = vpop.xlane.xlu0 %336
    %338 = vmax.xlane.f32.xlu0 %v266
    %v339 = vpop.xlane.xlu0 %338
    %340 = vmax.xlane.f32.xlu0 %v271
    %v341 = vpop.xlane.xlu0 %340
    %342 = vmax.xlane.f32.xlu0 %v276
    %v343 = vpop.xlane.xlu0 %342
    %344 = vmax.xlane.f32.xlu0 %v281
    %v345 = vpop.xlane.xlu0 %344
    %346 = vmax.xlane.f32.xlu0 %v286
    %v347 = vpop.xlane.xlu0 %346
    %348 = vmax.xlane.f32.xlu0 %v291
    %v349 = vpop.xlane.xlu0 %348
    %350 = vmax.xlane.f32.xlu0 %v296
    %v351 = vpop.xlane.xlu0 %350
    %352 = vmax.xlane.f32.xlu0 %v301
    %v353 = vpop.xlane.xlu0 %352
    %354 = vmax.xlane.f32.xlu0 %v306
    %v355 = vpop.xlane.xlu0 %354
    %356 = vmax.xlane.f32.xlu0 %v311
    %v357 = vpop.xlane.xlu0 %356
    %358 = vmax.xlane.f32.xlu0 %v316
    %v359 = vpop.xlane.xlu0 %358
    %360 = vmax.xlane.f32.xlu0 %v321
    %v361 = vpop.xlane.xlu0 %360
    %362 = vmax.xlane.f32.xlu0 %v326
    %v363 = vpop.xlane.xlu0 %362
    %364 = vmax.xlane.f32.xlu0 %v331
    %v365 = vpop.xlane.xlu0 %364
    %v366 = vsub.f32 %v256, %v335
    %v367 = vsub.f32 %v261, %v337
    %v368 = vsub.f32 %v266, %v339
    %v369 = vsub.f32 %v271, %v341
    %v370 = vsub.f32 %v276, %v343
    %v371 = vsub.f32 %v281, %v345
    %v372 = vsub.f32 %v286, %v347
    %v373 = vsub.f32 %v291, %v349
    %v374 = vsub.f32 %v296, %v351
    %v375 = vsub.f32 %v301, %v353
    %v376 = vsub.f32 %v306, %v355
    %v377 = vsub.f32 %v311, %v357
    %v378 = vsub.f32 %v316, %v359
    %v379 = vsub.f32 %v321, %v361
    %v380 = vsub.f32 %v326, %v363
    %v381 = vsub.f32 %v331, %v365
    %v382 = vmul.f32 %v366, 1.442695
    %v383 = vpow.pop %v382
    %v384 = vmul.f32 %v367, 1.442695
    %v385 = vpow.pop %v384
    %v386 = vmul.f32 %v368, 1.442695
    %v387 = vpow.pop %v386
    %v388 = vmul.f32 %v369, 1.442695
    %v389 = vpow.pop %v388
    %v390 = vmul.f32 %v370, 1.442695
    %v391 = vpow.pop %v390
    %v392 = vmul.f32 %v371, 1.442695
    %v393 = vpow.pop %v392
    %v394 = vmul.f32 %v372, 1.442695
    %v395 = vpow.pop %v394
    %v396 = vmul.f32 %v373, 1.442695
    %v397 = vpow.pop %v396
    %v398 = vmul.f32 %v374, 1.442695
    %v399 = vpow.pop %v398
    %v400 = vmul.f32 %v375, 1.442695
    %v401 = vpow.pop %v400
    %v402 = vmul.f32 %v376, 1.442695
    %v403 = vpow.pop %v402
    %v404 = vmul.f32 %v377, 1.442695
    %v405 = vpow.pop %v404
    %v406 = vmul.f32 %v378, 1.442695
    %v407 = vpow.pop %v406
    %v408 = vmul.f32 %v379, 1.442695
    %v409 = vpow.pop %v408
    %v410 = vmul.f32 %v380, 1.442695
    %v411 = vpow.pop %v410
    %v412 = vmul.f32 %v381, 1.442695
    %v413 = vpow.pop %v412
    %414 = vadd.xlane.f32.xlu0 %v383
    %v415 = vpop.xlane.xlu0 %414
    %416 = vadd.xlane.f32.xlu0 %v385
    %v417 = vpop.xlane.xlu0 %416
    %418 = vadd.xlane.f32.xlu0 %v387
    %v419 = vpop.xlane.xlu0 %418
    %420 = vadd.xlane.f32.xlu0 %v389
    %v421 = vpop.xlane.xlu0 %420
    %422 = vadd.xlane.f32.xlu0 %v391
    %v423 = vpop.xlane.xlu0 %422
    %424 = vadd.xlane.f32.xlu0 %v393
    %v425 = vpop.xlane.xlu0 %424
    %426 = vadd.xlane.f32.xlu0 %v395
    %v427 = vpop.xlane.xlu0 %426
    %428 = vadd.xlane.f32.xlu0 %v397
    %v429 = vpop.xlane.xlu0 %428
    %430 = vadd.xlane.f32.xlu0 %v399
    %v431 = vpop.xlane.xlu0 %430
    %432 = vadd.xlane.f32.xlu0 %v401
    %v433 = vpop.xlane.xlu0 %432
    %434 = vadd.xlane.f32.xlu0 %v403
    %v435 = vpop.xlane.xlu0 %434
    %436 = vadd.xlane.f32.xlu0 %v405
    %v437 = vpop.xlane.xlu0 %436
    %438 = vadd.xlane.f32.xlu0 %v407
    %v439 = vpop.xlane.xlu0 %438
    %440 = vadd.xlane.f32.xlu0 %v409
    %v441 = vpop.xlane.xlu0 %440
    %442 = vadd.xlane.f32.xlu0 %v411
    %v443 = vpop.xlane.xlu0 %442
    %444 = vadd.xlane.f32.xlu0 %v413
    %v445 = vpop.xlane.xlu0 %444
    %v446 = vrcp.pop %v415
    %v447 = vrcp.pop %v417
    %v448 = vrcp.pop %v419
    %v449 = vrcp.pop %v421
    %v450 = vrcp.pop %v423
    %v451 = vrcp.pop %v425
    %v452 = vrcp.pop %v427
    %v453 = vrcp.pop %v429
    %v454 = vrcp.pop %v431
    %v455 = vrcp.pop %v433
    %v456 = vrcp.pop %v435
    %v457 = vrcp.pop %v437
    %v458 = vrcp.pop %v439
    %v459 = vrcp.pop %v441
    %v460 = vrcp.pop %v443
    %v461 = vrcp.pop %v445
    %v462 = vmul.f32 %v415, %v446
    %v463 = vmul.f32 %v417, %v447
    %v464 = vmul.f32 %v419, %v448
    %v465 = vmul.f32 %v421, %v449
    %v466 = vmul.f32 %v423, %v450
    %v467 = vmul.f32 %v425, %v451
    %v468 = vmul.f32 %v427, %v452
    %v469 = vmul.f32 %v429, %v453
    %v470 = vmul.f32 %v431, %v454
    %v471 = vmul.f32 %v433, %v455
    %v472 = vmul.f32 %v435, %v456
    %v473 = vmul.f32 %v437, %v457
    %v474 = vmul.f32 %v439, %v458
    %v475 = vmul.f32 %v441, %v459
    %v476 = vmul.f32 %v443, %v460
    %v477 = vmul.f32 %v445, %v461
    %v478 = vsub.f32 2.0, %v462
    %v479 = vsub.f32 2.0, %v463
    %v480 = vsub.f32 2.0, %v464
    %v481 = vsub.f32 2.0, %v465
    %v482 = vsub.f32 2.0, %v466
    %v483 = vsub.f32 2.0, %v467
    %v484 = vsub.f32 2.0, %v468
    %v485 = vsub.f32 2.0, %v469
    %v486 = vsub.f32 2.0, %v470
    %v487 = vsub.f32 2.0, %v471
    %v488 = vsub.f32 2.0, %v472
    %v489 = vsub.f32 2.0, %v473
    %v490 = vsub.f32 2.0, %v474
    %v491 = vsub.f32 2.0, %v475
    %v492 = vsub.f32 2.0, %v476
    %v493 = vsub.f32 2.0, %v477
    %v494 = vmul.f32 %v446, %v478
    %v495 = vmul.f32 %v447, %v479
    %v496 = vmul.f32 %v448, %v480
    %v497 = vmul.f32 %v449, %v481
    %v498 = vmul.f32 %v450, %v482
    %v499 = vmul.f32 %v451, %v483
    %v500 = vmul.f32 %v452, %v484
    %v501 = vmul.f32 %v453, %v485
    %v502 = vmul.f32 %v454, %v486
    %v503 = vmul.f32 %v455, %v487
    %v504 = vmul.f32 %v456, %v488
    %v505 = vmul.f32 %v457, %v489
    %v506 = vmul.f32 %v458, %v490
    %v507 = vmul.f32 %v459, %v491
    %v508 = vmul.f32 %v460, %v492
    %v509 = vmul.f32 %v461, %v493
    %v510 = vmul.f32 %v383, %v494
    %v511 = vmul.f32 %v385, %v495
    %v512 = vmul.f32 %v387, %v496
    %v513 = vmul.f32 %v389, %v497
    %v514 = vmul.f32 %v391, %v498
    %v515 = vmul.f32 %v393, %v499
    %v516 = vmul.f32 %v395, %v500
    %v517 = vmul.f32 %v397, %v501
    %v518 = vmul.f32 %v399, %v502
    %v519 = vmul.f32 %v401, %v503
    %v520 = vmul.f32 %v403, %v504
    %v521 = vmul.f32 %v405, %v505
    %v522 = vmul.f32 %v407, %v506
    %v523 = vmul.f32 %v409, %v507
    %v524 = vmul.f32 %v411, %v508
    %v525 = vmul.f32 %v413, %v509
    %526 = vrot.lane.b32.xlu0 %v21, 112
    %v527 = vpop.permute.xlu0 %526
    %528 = vrot.lane.b32.xlu0 %v22, 112
    %v529 = vpop.permute.xlu0 %528
    %530 = vrot.lane.b32.xlu0 %v23, 112
    %v531 = vpop.permute.xlu0 %530
    %532 = vrot.lane.b32.xlu0 %v24, 112
    %v533 = vpop.permute.xlu0 %532
    %534 = vrot.lane.b32.xlu0 %v25, 112
    %v535 = vpop.permute.xlu0 %534
    %536 = vrot.lane.b32.xlu0 %v26, 112
    %v537 = vpop.permute.xlu0 %536
    %538 = vrot.lane.b32.xlu0 %v27, 112
    %v539 = vpop.permute.xlu0 %538
    %540 = vrot.lane.b32.xlu0 %v28, 112
    %v541 = vpop.permute.xlu0 %540
    %542 = vrot.lane.b32.xlu0 %v29, 112
    %v543 = vpop.permute.xlu0 %542
    %544 = vrot.lane.b32.xlu0 %v30, 112
    %v545 = vpop.permute.xlu0 %544
    %546 = vrot.lane.b32.xlu0 %v31, 112
    %v547 = vpop.permute.xlu0 %546
    %548 = vrot.lane.b32.xlu0 %v32, 112
    %v549 = vpop.permute.xlu0 %548
    %550 = vrot.lane.b32.xlu0 %v33, 112
    %v551 = vpop.permute.xlu0 %550
    %552 = vrot.lane.b32.xlu0 %v34, 112
    %v553 = vpop.permute.xlu0 %552
    %554 = vrot.lane.b32.xlu0 %v35, 112
    %v555 = vpop.permute.xlu0 %554
    %556 = vrot.lane.b32.xlu0 %v36, 112
    %v557 = vpop.permute.xlu0 %556
    %574 = vmatprep.subr.mxu0 0.0
    %575 = vmatpush1.msra.mxu0 %v527
    %576 = vmatprep.subr.mxu0 0.0
    %577 = vmatpush1.msra.mxu0 %v529
    %578 = vmatprep.subr.mxu0 0.0
    %579 = vmatpush1.msra.mxu0 %v531
    %580 = vmatprep.subr.mxu0 0.0
    %581 = vmatpush1.msra.mxu0 %v533
    %582 = vmatprep.subr.mxu0 0.0
    %583 = vmatpush1.msra.mxu0 %v535
    %584 = vmatprep.subr.mxu0 0.0
    %585 = vmatpush1.msra.mxu0 %v537
    %586 = vmatprep.subr.mxu0 0.0
    %587 = vmatpush1.msra.mxu0 %v539
    %588 = vmatprep.subr.mxu0 0.0
    %589 = vmatpush1.msra.mxu0 %v541
    %590 = vmatprep.subr.mxu0 0.0
    %591 = vmatpush1.msra.mxu0 %v543
    %592 = vmatprep.subr.mxu0 0.0
    %593 = vmatpush1.msra.mxu0 %v545
    %594 = vmatprep.subr.mxu0 0.0
    %595 = vmatpush1.msra.mxu0 %v547
    %596 = vmatprep.subr.mxu0 0.0
    %597 = vmatpush1.msra.mxu0 %v549
    %598 = vmatprep.subr.mxu0 0.0
    %599 = vmatpush1.msra.mxu0 %v551
    %600 = vmatprep.subr.mxu0 0.0
    %601 = vmatpush1.msra.mxu0 %v553
    %602 = vmatprep.subr.mxu0 0.0
    %603 = vmatpush1.msra.mxu0 %v555
    %604 = vmatprep.subr.mxu0 0.0
    %605 = vmatpush1.msra.mxu0 %v557
    %606 = vmatprep.subr.mxu0 0.0
    %607 = vmatpush1.msra.mxu0 0.0
    %608 = vmatprep.subr.mxu0 0.0
    %609 = vmatpush1.msra.mxu0 0.0
    %610 = vmatprep.subr.mxu0 0.0
    %611 = vmatpush1.msra.mxu0 0.0
    %612 = vmatprep.subr.mxu0 0.0
    %613 = vmatpush1.msra.mxu0 0.0
    %614 = vmatprep.subr.mxu0 0.0
    %615 = vmatpush1.msra.mxu0 0.0
    %616 = vmatprep.subr.mxu0 0.0
    %617 = vmatpush1.msra.mxu0 0.0
    %618 = vmatprep.subr.mxu0 0.0
    %619 = vmatpush1.msra.mxu0 0.0
    %620 = vmatprep.subr.mxu0 0.0
    %621 = vmatpush1.msra.mxu0 0.0
    %622 = vmatprep.subr.mxu0 0.0
    %623 = vmatpush1.msra.mxu0 0.0
    %624 = vmatprep.subr.mxu0 0.0
    %625 = vmatpush1.msra.mxu0 0.0
    %626 = vmatprep.subr.mxu0 0.0
    %627 = vmatpush1.msra.mxu0 0.0
    %628 = vmatprep.subr.mxu0 0.0
    %629 = vmatpush1.msra.mxu0 0.0
    %630 = vmatprep.subr.mxu0 0.0
    %631 = vmatpush1.msra.mxu0 0.0
    %632 = vmatprep.subr.mxu0 0.0
    %633 = vmatpush1.msra.mxu0 0.0
    %634 = vmatprep.subr.mxu0 0.0
    %635 = vmatpush1.msra.mxu0 0.0
    %636 = vmatprep.subr.mxu0 0.0
    %637 = vmatpush1.msra.mxu0 0.0
    %638 = vmatprep.mubr.f32.mxu0 0.0
    %639 = vmatmul.mubr.f32.gmra.mrb[0].mxu0 %v510
    %v640 = vpop.f32.mrb[0].mxu0
    %v641 = vadd.f32 0.0, %v640
    %v642 = vpop.f32.mrb[0].mxu0
    %643 = vmatprep.mubr.f32.mxu0 0.0
    %644 = vmatmul.mubr.f32.gmra.mrb[0].mxu0 %v511
    %v645 = vpop.f32.mrb[0].mxu0
    %v646 = vadd.f32 0.0, %v645
    %v647 = vpop.f32.mrb[0].mxu0
    %648 = vmatprep.mubr.f32.mxu0 0.0
    %649 = vmatmul.mubr.f32.gmra.mrb[0].mxu0 %v512
    %v650 = vpop.f32.mrb[0].mxu0
    %v651 = vadd.f32 0.0, %v650
    %v652 = vpop.f32.mrb[0].mxu0
    %653 = vmatprep.mubr.f32.mxu0 0.0
    %654 = vmatmul.mubr.f32.gmra.mrb[0].mxu0 %v513
    %v655 = vpop.f32.mrb[0].mxu0
    %v656 = vadd.f32 0.0, %v655
    %v657 = vpop.f32.mrb[0].mxu0
    %658 = vmatprep.mubr.f32.mxu0 0.0
    %659 = vmatmul.mubr.f32.gmra.mrb[0].mxu0 %v514
    %v660 = vpop.f32.mrb[0].mxu0
    %v661 = vadd.f32 0.0, %v660
    %v662 = vpop.f32.mrb[0].mxu0
    %663 = vmatprep.mubr.f32.mxu0 0.0
    %664 = vmatmul.mubr.f32.gmra.mrb[0].mxu0 %v515
    %v665 = vpop.f32.mrb[0].mxu0
    %v666 = vadd.f32 0.0, %v665
    %v667 = vpop.f32.mrb[0].mxu0
    %668 = vmatprep.mubr.f32.mxu0 0.0
    %669 = vmatmul.mubr.f32.gmra.mrb[0].mxu0 %v516
    %v670 = vpop.f32.mrb[0].mxu0
    %v671 = vadd.f32 0.0, %v670
    %v672 = vpop.f32.mrb[0].mxu0
    %673 = vmatprep.mubr.f32.mxu0 0.0
    %674 = vmatmul.mubr.f32.gmra.mrb[0].mxu0 %v517
    %v675 = vpop.f32.mrb[0].mxu0
    %v676 = vadd.f32 0.0, %v675
    %v677 = vpop.f32.mrb[0].mxu0
    %678 = vmatprep.mubr.f32.mxu0 0.0
    %679 = vmatmul.mubr.f32.gmra.mrb[0].mxu0 %v518
    %v680 = vpop.f32.mrb[0].mxu0
    %v681 = vadd.f32 0.0, %v680
    %v682 = vpop.f32.mrb[0].mxu0
    %683 = vmatprep.mubr.f32.mxu0 0.0
    %684 = vmatmul.mubr.f32.gmra.mrb[0].mxu0 %v519
    %v685 = vpop.f32.mrb[0].mxu0
    %v686 = vadd.f32 0.0, %v685
    %v687 = vpop.f32.mrb[0].mxu0
    %688 = vmatprep.mubr.f32.mxu0 0.0
    %689 = vmatmul.mubr.f32.gmra.mrb[0].mxu0 %v520
    %v690 = vpop.f32.mrb[0].mxu0
    %v691 = vadd.f32 0.0, %v690
    %v692 = vpop.f32.mrb[0].mxu0
    %693 = vmatprep.mubr.f32.mxu0 0.0
    %694 = vmatmul.mubr.f32.gmra.mrb[0].mxu0 %v521
    %v695 = vpop.f32.mrb[0].mxu0
    %v696 = vadd.f32 0.0, %v695
    %v697 = vpop.f32.mrb[0].mxu0
    %698 = vmatprep.mubr.f32.mxu0 0.0
    %699 = vmatmul.mubr.f32.gmra.mrb[0].mxu0 %v522
    %v700 = vpop.f32.mrb[0].mxu0
    %v701 = vadd.f32 0.0, %v700
    %v702 = vpop.f32.mrb[0].mxu0
    %703 = vmatprep.mubr.f32.mxu0 0.0
    %704 = vmatmul.mubr.f32.gmra.mrb[0].mxu0 %v523
    %v705 = vpop.f32.mrb[0].mxu0
    %v706 = vadd.f32 0.0, %v705
    %v707 = vpop.f32.mrb[0].mxu0
    %708 = vmatprep.mubr.f32.mxu0 0.0
    %709 = vmatmul.mubr.f32.gmra.mrb[0].mxu0 %v524
    %v710 = vpop.f32.mrb[0].mxu0
    %v711 = vadd.f32 0.0, %v710
    %v712 = vpop.f32.mrb[0].mxu0
    %713 = vmatprep.mubr.f32.mxu0 0.0
    %714 = vmatmul.mubr.f32.gmra.mrb[0].mxu0 %v525
    %v715 = vpop.f32.mrb[0].mxu0
    %v716 = vadd.f32 0.0, %v715
    %v717 = vpop.f32.mrb[0].mxu0
    %718 = vdwg.mxu0
    %v719 = vld [vmem:[%s3] sm:$0xff]
    %v720 = vld [vmem:[%s3 + $0x8] sm:$0xff]
    %v721 = vld [vmem:[%s3 + $0x10] sm:$0xff]
    %v722 = vld [vmem:[%s3 + $0x18] sm:$0xff]
    %v723 = vld [vmem:[%s3 + $0x20] sm:$0xff]
    %v724 = vld [vmem:[%s3 + $0x28] sm:$0xff]
    %v725 = vld [vmem:[%s4] sm:$0xff]
    %v726 = vld [vmem:[%s4 + $0x8] sm:$0xff]
    %v727 = vld [vmem:[%s4 + $0x10] sm:$0xff]
    %v728 = vld [vmem:[%s4 + $0x18] sm:$0xff]
    %v729 = vld [vmem:[%s4 + $0x20] sm:$0xff]
    %v730 = vld [vmem:[%s4 + $0x28] sm:$0xff]
    %732 = vset.pattern.permute.xlu0 0
    %733 = vperm.xlu0 %732, %v725
    %v734 = vpop.permute.xlu0 %733
    %737 = vset.pattern.permute.xlu0 0
    %738 = vperm.xlu0 %737, %v726
    %v739 = vpop.permute.xlu0 %738
    %742 = vset.pattern.permute.xlu0 0
    %743 = vperm.xlu0 %742, %v727
    %v744 = vpop.permute.xlu0 %743
    %747 = vset.pattern.permute.xlu0 0
    %748 = vperm.xlu0 %747, %v728
    %v749 = vpop.permute.xlu0 %748
    %752 = vset.pattern.permute.xlu0 0
    %753 = vperm.xlu0 %752, %v729
    %v754 = vpop.permute.xlu0 %753
    %757 = vset.pattern.permute.xlu0 0
    %758 = vperm.xlu0 %757, %v730
    %v759 = vpop.permute.xlu0 %758
    %v762 = vsel %vm108, %v719, 0
    %v765 = vsel %vm108, %v720, 0
    %v768 = vsel %vm108, %v721, 0
    %v771 = vsel %vm108, %v722, 0
    %v774 = vsel %vm108, %v723, 0
    %v777 = vsel %vm108, %v724, 0
    %v780 = vsel %vm108, %v641, 0
    %v783 = vsel %vm108, %v646, 0
    %v786 = vsel %vm108, %v651, 0
    %v789 = vsel %vm108, %v656, 0
    %v792 = vsel %vm108, %v661, 0
    %v795 = vsel %vm108, %v666, 0
    %v798 = vsel %vm108, %v671, 0
    %v801 = vsel %vm108, %v676, 0
    %v804 = vsel %vm108, %v681, 0
    %v807 = vsel %vm108, %v686, 0
    %v810 = vsel %vm108, %v691, 0
    %v813 = vsel %vm108, %v696, 0
    %v816 = vsel %vm108, %v701, 0
    %v819 = vsel %vm108, %v706, 0
    %v822 = vsel %vm108, %v711, 0
    %v825 = vsel %vm108, %v716, 0
    %827 = vmatprep.subr.mxu0 0.0
    %828 = vmatpush1.xpose.msra.mxu0 %v780
    %829 = vmatprep.subr.mxu0 0.0
    %830 = vmatpush1.xpose.msra.mxu0 %v783
    %831 = vmatprep.subr.mxu0 0.0
    %832 = vmatpush1.xpose.msra.mxu0 %v786
    %833 = vmatprep.subr.mxu0 0.0
    %834 = vmatpush1.xpose.msra.mxu0 %v789
    %835 = vmatprep.subr.mxu0 0.0
    %836 = vmatpush1.xpose.msra.mxu0 %v792
    %837 = vmatprep.subr.mxu0 0.0
    %838 = vmatpush1.xpose.msra.mxu0 %v795
    %839 = vmatprep.subr.mxu0 0.0
    %840 = vmatpush1.xpose.msra.mxu0 %v798
    %841 = vmatprep.subr.mxu0 0.0
    %842 = vmatpush1.xpose.msra.mxu0 %v801
    %843 = vmatprep.subr.mxu0 0.0
    %844 = vmatpush1.xpose.msra.mxu0 %v804
    %845 = vmatprep.subr.mxu0 0.0
    %846 = vmatpush1.xpose.msra.mxu0 %v807
    %847 = vmatprep.subr.mxu0 0.0
    %848 = vmatpush1.xpose.msra.mxu0 %v810
    %849 = vmatprep.subr.mxu0 0.0
    %850 = vmatpush1.xpose.msra.mxu0 %v813
    %851 = vmatprep.subr.mxu0 0.0
    %852 = vmatpush1.xpose.msra.mxu0 %v816
    %853 = vmatprep.subr.mxu0 0.0
    %854 = vmatpush1.xpose.msra.mxu0 %v819
    %855 = vmatprep.subr.mxu0 0.0
    %856 = vmatpush1.xpose.msra.mxu0 %v822
    %857 = vmatprep.subr.mxu0 0.0
    %858 = vmatpush1.xpose.msra.mxu0 %v825
    %859 = vmatprep.subr.mxu0 0.0
    %860 = vmatpush1.xpose.msra.mxu0 0.0
    %861 = vmatprep.subr.mxu0 0.0
    %862 = vmatpush1.xpose.msra.mxu0 0.0
    %863 = vmatprep.subr.mxu0 0.0
    %864 = vmatpush1.xpose.msra.mxu0 0.0
    %865 = vmatprep.subr.mxu0 0.0
    %866 = vmatpush1.xpose.msra.mxu0 0.0
    %867 = vmatprep.subr.mxu0 0.0
    %868 = vmatpush1.xpose.msra.mxu0 0.0
    %869 = vmatprep.subr.mxu0 0.0
    %870 = vmatpush1.xpose.msra.mxu0 0.0
    %871 = vmatprep.subr.mxu0 0.0
    %872 = vmatpush1.xpose.msra.mxu0 0.0
    %873 = vmatprep.subr.mxu0 0.0
    %874 = vmatpush1.xpose.msra.mxu0 0.0
    %875 = vmatprep.subr.mxu0 0.0
    %876 = vmatpush1.xpose.msra.mxu0 0.0
    %877 = vmatprep.subr.mxu0 0.0
    %878 = vmatpush1.xpose.msra.mxu0 0.0
    %879 = vmatprep.subr.mxu0 0.0
    %880 = vmatpush1.xpose.msra.mxu0 0.0
    %881 = vmatprep.subr.mxu0 0.0
    %882 = vmatpush1.xpose.msra.mxu0 0.0
    %883 = vmatprep.subr.mxu0 0.0
    %884 = vmatpush1.xpose.msra.mxu0 0.0
    %885 = vmatprep.subr.mxu0 0.0
    %886 = vmatpush1.xpose.msra.mxu0 0.0
    %887 = vmatprep.subr.mxu0 0.0
    %888 = vmatpush1.xpose.msra.mxu0 0.0
    %889 = vmatprep.subr.mxu0 0.0
    %890 = vmatpush1.xpose.msra.mxu0 0.0
    %891 = vmatprep.mubr.f32.mxu0 0.0
    %892 = vmatmul.mubr.f32.gmra.mrb[0].mxu0 %v762
    %v893 = vpop.f32.mrb[0].mxu0
    %v894 = vadd.f32 %v734, %v893
    %v895 = vpop.f32.mrb[0].mxu0
    %896 = vmatprep.mubr.f32.mxu0 0.0
    %897 = vmatmul.mubr.f32.gmra.mrb[0].mxu0 %v765
    %v898 = vpop.f32.mrb[0].mxu0
    %v899 = vadd.f32 %v739, %v898
    %v900 = vpop.f32.mrb[0].mxu0
    %901 = vmatprep.mubr.f32.mxu0 0.0
    %902 = vmatmul.mubr.f32.gmra.mrb[0].mxu0 %v768
    %v903 = vpop.f32.mrb[0].mxu0
    %v904 = vadd.f32 %v744, %v903
    %v905 = vpop.f32.mrb[0].mxu0
    %906 = vmatprep.mubr.f32.mxu0 0.0
    %907 = vmatmul.mubr.f32.gmra.mrb[0].mxu0 %v771
    %v908 = vpop.f32.mrb[0].mxu0
    %v909 = vadd.f32 %v749, %v908
    %v910 = vpop.f32.mrb[0].mxu0
    %911 = vmatprep.mubr.f32.mxu0 0.0
    %912 = vmatmul.mubr.f32.gmra.mrb[0].mxu0 %v774
    %v913 = vpop.f32.mrb[0].mxu0
    %v914 = vadd.f32 %v754, %v913
    %v915 = vpop.f32.mrb[0].mxu0
    %916 = vmatprep.mubr.f32.mxu0 0.0
    %917 = vmatmul.mubr.f32.gmra.mrb[0].mxu0 %v777
    %v918 = vpop.f32.mrb[0].mxu0
    %v919 = vadd.f32 %v759, %v918
    %v920 = vpop.f32.mrb[0].mxu0
    %921 = vdwg.mxu0
    %922 = vst [vmem:[#allocation2] sm:$0xff] %v894
    %923 = vst [vmem:[#allocation2 + $0x8] sm:$0xff] %v899
    %924 = vst [vmem:[#allocation2 + $0x10] sm:$0xff] %v904
    %925 = vst [vmem:[#allocation2 + $0x18] sm:$0xff] %v909
    %926 = vst [vmem:[#allocation2 + $0x20] sm:$0xff] %v914
    %927 = vst [vmem:[#allocation2 + $0x28] sm:$0xff] %v919
    // Predicated region
    $region22: #{tpu_custom_call.1} parent=1 // pred_check
      _
    $region23: #{tpu_custom_call.1} parent=1 // pred_check_branch
      %929 = sbr.rel (0) target = $region25
    $region24: #{tpu_custom_call.1} parent=1 // pred_region
      %s931 = ssub.s32 768, 768
      %932 = vsyncadd [#allocation3], %s931
      %s933 = sshll.u32 [#allocation2], 4
      %s934 = int_to_ptr.vmem [resolvable:$true] %s933
      %939 = dma.vmem_to_hbm [thread:$0]  %s934, 768, %s5, [#allocation3], 128, 128, 8
    $region25: #{tpu_custom_call.1} parent=1 // pred_fallthru
      _
    // Predicated region
    $region26: #{tpu_custom_call.1} parent=1 // pred_check
      _
    $region27: #{tpu_custom_call.1} parent=1 // pred_check_branch
      %941 = sbr.rel (0) target = $region29
    $region28: #{tpu_custom_call.1} parent=1 // pred_region
      %942 = dma.done [#allocation3], 768
    $region29: #{tpu_custom_call.1} parent=1 // pred_fallthru
      _
    %943 = vsyncpa [#allocation3], 1

// kernel: tpu_custom_call.1
$region0: #{tpu_custom_call.1}
  #allocation0 [shape = 'u32[]', space=smem, size = 0x4, offset = 0x4, fixed_abs, tag = 'smem constant byte address 0x4 - core index']
  #allocation1 [shape = 'u32[144,128]{1,0:T(1,128)}', space=vmem, size = 0x12000, scoped, tag = 'internal scratch']
  %s0 = inlined_call_operand.vmem [shape: f32[128,24], index: 0, kind: input, shape index: {}]
  %s1 = inlined_call_operand.vmem [shape: f32[128,24], index: 1, kind: input, shape index: {}]
  %s2 = inlined_call_operand.vmem [shape: f32[1,128], index: 2, kind: input, shape index: {}]
  %s3 = inlined_call_operand.vmem [shape: f32[48,8], index: 3, kind: input, shape index: {}]
  %s4 = inlined_call_operand.vmem [shape: f32[48,1], index: 4, kind: input, shape index: {}]
  %s5 = inlined_call_operand.hbm [shape: f32[48,128], index: 5, kind: output, shape index: {}]
  %s6 = sld [smem:[#allocation0]]
  $region30: #{tpu_custom_call.1} parent=0
    _
  %s8 = ssub.s32 1, %s6
  %s9 = scalar_select 0, %s8, %s6
  $region1: #{tpu_custom_call.1} parent=0
    #allocation2 [shape = 'u8[24576]{0}', space=vmem, size = 0x6000, scoped, tag = 'output window, operand 0, single buffered']
    #allocation3 [shape = 's32[1]{0}', space=sflag, size = 0x4, scoped, tag = 'scoped memory for tpu_custom_call.1']
    %10 = vsyncpa [#allocation3], 0
    // Predicated region
    $region2: #{tpu_custom_call.1} parent=1 // pred_check
      _
    $region3: #{tpu_custom_call.1} parent=1 // pred_check_branch
      %12 = sbr.rel (0) target = $region5
    $region4: #{tpu_custom_call.1} parent=1 // pred_region
      _
    $region5: #{tpu_custom_call.1} parent=1 // pred_fallthru
      _
    // Predicated region
    $region6: #{tpu_custom_call.1} parent=1 // pred_check
      _
    $region7: #{tpu_custom_call.1} parent=1 // pred_check_branch
      %14 = sbr.rel (0) target = $region9
    $region8: #{tpu_custom_call.1} parent=1 // pred_region
      _
    $region9: #{tpu_custom_call.1} parent=1 // pred_fallthru
      _
    // Predicated region
    $region10: #{tpu_custom_call.1} parent=1 // pred_check
      _
    $region11: #{tpu_custom_call.1} parent=1 // pred_check_branch
      %16 = sbr.rel (0) target = $region13
    $region12: #{tpu_custom_call.1} parent=1 // pred_region
      _
    $region13: #{tpu_custom_call.1} parent=1 // pred_fallthru
      _
    // Predicated region
    $region14: #{tpu_custom_call.1} parent=1 // pred_check
      _
    $region15: #{tpu_custom_call.1} parent=1 // pred_check_branch
      %18 = sbr.rel (0) target = $region17
    $region16: #{tpu_custom_call.1} parent=1 // pred_region
      _
    $region17: #{tpu_custom_call.1} parent=1 // pred_fallthru
      _
    // Predicated region
    $region18: #{tpu_custom_call.1} parent=1 // pred_check
      _
    $region19: #{tpu_custom_call.1} parent=1 // pred_check_branch
      %20 = sbr.rel (0) target = $region21
    $region20: #{tpu_custom_call.1} parent=1 // pred_region
      _
    $region21: #{tpu_custom_call.1} parent=1 // pred_fallthru
      _
    %v21 = vld [vmem:[%s1] sm:$0xff]
    %v22 = vld [vmem:[%s1 + $0x8] sm:$0xff]
    %v23 = vld [vmem:[%s1 + $0x10] sm:$0xff]
    %v24 = vld [vmem:[%s1 + $0x18] sm:$0xff]
    %v25 = vld [vmem:[%s1 + $0x20] sm:$0xff]
    %v26 = vld [vmem:[%s1 + $0x28] sm:$0xff]
    %v27 = vld [vmem:[%s1 + $0x30] sm:$0xff]
    %v28 = vld [vmem:[%s1 + $0x38] sm:$0xff]
    %v29 = vld [vmem:[%s1 + $0x40] sm:$0xff]
    %v30 = vld [vmem:[%s1 + $0x48] sm:$0xff]
    %v31 = vld [vmem:[%s1 + $0x50] sm:$0xff]
    %v32 = vld [vmem:[%s1 + $0x58] sm:$0xff]
    %v33 = vld [vmem:[%s1 + $0x60] sm:$0xff]
    %v34 = vld [vmem:[%s1 + $0x68] sm:$0xff]
    %v35 = vld [vmem:[%s1 + $0x70] sm:$0xff]
    %v36 = vld [vmem:[%s1 + $0x78] sm:$0xff]
    %v37 = vld [vmem:[%s0] sm:$0xff]
    %v38 = vld [vmem:[%s0 + $0x8] sm:$0xff]
    %v39 = vld [vmem:[%s0 + $0x10] sm:$0xff]
    %v40 = vld [vmem:[%s0 + $0x18] sm:$0xff]
    %v41 = vld [vmem:[%s0 + $0x20] sm:$0xff]
    %v42 = vld [vmem:[%s0 + $0x28] sm:$0xff]
    %v43 = vld [vmem:[%s0 + $0x30] sm:$0xff]
    %v44 = vld [vmem:[%s0 + $0x38] sm:$0xff]
    %v45 = vld [vmem:[%s0 + $0x40] sm:$0xff]
    %v46 = vld [vmem:[%s0 + $0x48] sm:$0xff]
    %v47 = vld [vmem:[%s0 + $0x50] sm:$0xff]
    %v48 = vld [vmem:[%s0 + $0x58] sm:$0xff]
    %v49 = vld [vmem:[%s0 + $0x60] sm:$0xff]
    %v50 = vld [vmem:[%s0 + $0x68] sm:$0xff]
    %v51 = vld [vmem:[%s0 + $0x70] sm:$0xff]
    %v52 = vld [vmem:[%s0 + $0x78] sm:$0xff]
    %v53 = vld [vmem:[%s2] sm:$0x1]
    %v55 = vlaneseq
    %v56 = vshrl.u32 %v55, 7
    %v57 = vsub.s32 0, %v56
    %v58 = vrot.slane %v53, %v57
    %76 = vrot.lane.b32.xlu0 %v37, 120
    %v77 = vpop.permute.xlu0 %76
    %78 = vrot.lane.b32.xlu0 %v38, 120
    %v79 = vpop.permute.xlu0 %78
    %80 = vrot.lane.b32.xlu0 %v39, 120
    %v81 = vpop.permute.xlu0 %80
    %82 = vrot.lane.b32.xlu0 %v40, 120
    %v83 = vpop.permute.xlu0 %82
    %84 = vrot.lane.b32.xlu0 %v41, 120
    %v85 = vpop.permute.xlu0 %84
    %86 = vrot.lane.b32.xlu0 %v42, 120
    %v87 = vpop.permute.xlu0 %86
    %88 = vrot.lane.b32.xlu0 %v43, 120
    %v89 = vpop.permute.xlu0 %88
    %90 = vrot.lane.b32.xlu0 %v44, 120
    %v91 = vpop.permute.xlu0 %90
    %92 = vrot.lane.b32.xlu0 %v45, 120
    %v93 = vpop.permute.xlu0 %92
    %94 = vrot.lane.b32.xlu0 %v46, 120
    %v95 = vpop.permute.xlu0 %94
    %96 = vrot.lane.b32.xlu0 %v47, 120
    %v97 = vpop.permute.xlu0 %96
    %98 = vrot.lane.b32.xlu0 %v48, 120
    %v99 = vpop.permute.xlu0 %98
    %100 = vrot.lane.b32.xlu0 %v49, 120
    %v101 = vpop.permute.xlu0 %100
    %102 = vrot.lane.b32.xlu0 %v50, 120
    %v103 = vpop.permute.xlu0 %102
    %104 = vrot.lane.b32.xlu0 %v51, 120
    %v105 = vpop.permute.xlu0 %104
    %106 = vrot.lane.b32.xlu0 %v52, 120
    %v107 = vpop.permute.xlu0 %106
    %vm108 = vcmask 64512
    %v109 = vsel %vm108, %v77, 0
    %v111 = vsel %vm108, %v79, 0
    %v113 = vsel %vm108, %v81, 0
    %v115 = vsel %vm108, %v83, 0
    %v117 = vsel %vm108, %v85, 0
    %v119 = vsel %vm108, %v87, 0
    %v121 = vsel %vm108, %v89, 0
    %v123 = vsel %vm108, %v91, 0
    %v125 = vsel %vm108, %v93, 0
    %v127 = vsel %vm108, %v95, 0
    %v129 = vsel %vm108, %v97, 0
    %v131 = vsel %vm108, %v99, 0
    %v133 = vsel %vm108, %v101, 0
    %v135 = vsel %vm108, %v103, 0
    %v137 = vsel %vm108, %v105, 0
    %v139 = vsel %vm108, %v107, 0
    %v142 = vsel %vm108, %v21, 0
    %v145 = vsel %vm108, %v22, 0
    %v148 = vsel %vm108, %v23, 0
    %v151 = vsel %vm108, %v24, 0
    %v154 = vsel %vm108, %v25, 0
    %v157 = vsel %vm108, %v26, 0
    %v160 = vsel %vm108, %v27, 0
    %v163 = vsel %vm108, %v28, 0
    %v166 = vsel %vm108, %v29, 0
    %v169 = vsel %vm108, %v30, 0
    %v172 = vsel %vm108, %v31, 0
    %v175 = vsel %vm108, %v32, 0
    %v178 = vsel %vm108, %v33, 0
    %v181 = vsel %vm108, %v34, 0
    %v184 = vsel %vm108, %v35, 0
    %v187 = vsel %vm108, %v36, 0
    %189 = vmatprep.subr.mxu0 0.0
    %190 = vmatpush1.xpose.msra.mxu0 %v142
    %191 = vmatprep.subr.mxu0 0.0
    %192 = vmatpush1.xpose.msra.mxu0 %v145
    %193 = vmatprep.subr.mxu0 0.0
    %194 = vmatpush1.xpose.msra.mxu0 %v148
    %195 = vmatprep.subr.mxu0 0.0
    %196 = vmatpush1.xpose.msra.mxu0 %v151
    %197 = vmatprep.subr.mxu0 0.0
    %198 = vmatpush1.xpose.msra.mxu0 %v154
    %199 = vmatprep.subr.mxu0 0.0
    %200 = vmatpush1.xpose.msra.mxu0 %v157
    %201 = vmatprep.subr.mxu0 0.0
    %202 = vmatpush1.xpose.msra.mxu0 %v160
    %203 = vmatprep.subr.mxu0 0.0
    %204 = vmatpush1.xpose.msra.mxu0 %v163
    %205 = vmatprep.subr.mxu0 0.0
    %206 = vmatpush1.xpose.msra.mxu0 %v166
    %207 = vmatprep.subr.mxu0 0.0
    %208 = vmatpush1.xpose.msra.mxu0 %v169
    %209 = vmatprep.subr.mxu0 0.0
    %210 = vmatpush1.xpose.msra.mxu0 %v172
    %211 = vmatprep.subr.mxu0 0.0
    %212 = vmatpush1.xpose.msra.mxu0 %v175
    %213 = vmatprep.subr.mxu0 0.0
    %214 = vmatpush1.xpose.msra.mxu0 %v178
    %215 = vmatprep.subr.mxu0 0.0
    %216 = vmatpush1.xpose.msra.mxu0 %v181
    %217 = vmatprep.subr.mxu0 0.0
    %218 = vmatpush1.xpose.msra.mxu0 %v184
    %219 = vmatprep.subr.mxu0 0.0
    %220 = vmatpush1.xpose.msra.mxu0 %v187
    %221 = vmatprep.subr.mxu0 0.0
    %222 = vmatpush1.xpose.msra.mxu0 0.0
    %223 = vmatprep.subr.mxu0 0.0
    %224 = vmatpush1.xpose.msra.mxu0 0.0
    %225 = vmatprep.subr.mxu0 0.0
    %226 = vmatpush1.xpose.msra.mxu0 0.0
    %227 = vmatprep.subr.mxu0 0.0
    %228 = vmatpush1.xpose.msra.mxu0 0.0
    %229 = vmatprep.subr.mxu0 0.0
    %230 = vmatpush1.xpose.msra.mxu0 0.0
    %231 = vmatprep.subr.mxu0 0.0
    %232 = vmatpush1.xpose.msra.mxu0 0.0
    %233 = vmatprep.subr.mxu0 0.0
    %234 = vmatpush1.xpose.msra.mxu0 0.0
    %235 = vmatprep.subr.mxu0 0.0
    %236 = vmatpush1.xpose.msra.mxu0 0.0
    %237 = vmatprep.subr.mxu0 0.0
    %238 = vmatpush1.xpose.msra.mxu0 0.0
    %239 = vmatprep.subr.mxu0 0.0
    %240 = vmatpush1.xpose.msra.mxu0 0.0
    %241 = vmatprep.subr.mxu0 0.0
    %242 = vmatpush1.xpose.msra.mxu0 0.0
    %243 = vmatprep.subr.mxu0 0.0
    %244 = vmatpush1.xpose.msra.mxu0 0.0
    %245 = vmatprep.subr.mxu0 0.0
    %246 = vmatpush1.xpose.msra.mxu0 0.0
    %247 = vmatprep.subr.mxu0 0.0
    %248 = vmatpush1.xpose.msra.mxu0 0.0
    %249 = vmatprep.subr.mxu0 0.0
    %250 = vmatpush1.xpose.msra.mxu0 0.0
    %251 = vmatprep.subr.mxu0 0.0
    %252 = vmatpush1.xpose.msra.mxu0 0.0
    %253 = vmatprep.mubr.f32.mxu0 0.0
    %254 = vmatmul.mubr.f32.gmra.mrb[0].mxu0 %v109
    %v255 = vpop.f32.mrb[0].mxu0
    %v256 = vadd.f32 %v58, %v255
    %v257 = vpop.f32.mrb[0].mxu0
    %258 = vmatprep.mubr.f32.mxu0 0.0
    %259 = vmatmul.mubr.f32.gmra.mrb[0].mxu0 %v111
    %v260 = vpop.f32.mrb[0].mxu0
    %v261 = vadd.f32 %v58, %v260
    %v262 = vpop.f32.mrb[0].mxu0
    %263 = vmatprep.mubr.f32.mxu0 0.0
    %264 = vmatmul.mubr.f32.gmra.mrb[0].mxu0 %v113
    %v265 = vpop.f32.mrb[0].mxu0
    %v266 = vadd.f32 %v58, %v265
    %v267 = vpop.f32.mrb[0].mxu0
    %268 = vmatprep.mubr.f32.mxu0 0.0
    %269 = vmatmul.mubr.f32.gmra.mrb[0].mxu0 %v115
    %v270 = vpop.f32.mrb[0].mxu0
    %v271 = vadd.f32 %v58, %v270
    %v272 = vpop.f32.mrb[0].mxu0
    %273 = vmatprep.mubr.f32.mxu0 0.0
    %274 = vmatmul.mubr.f32.gmra.mrb[0].mxu0 %v117
    %v275 = vpop.f32.mrb[0].mxu0
    %v276 = vadd.f32 %v58, %v275
    %v277 = vpop.f32.mrb[0].mxu0
    %278 = vmatprep.mubr.f32.mxu0 0.0
    %279 = vmatmul.mubr.f32.gmra.mrb[0].mxu0 %v119
    %v280 = vpop.f32.mrb[0].mxu0
    %v281 = vadd.f32 %v58, %v280
    %v282 = vpop.f32.mrb[0].mxu0
    %283 = vmatprep.mubr.f32.mxu0 0.0
    %284 = vmatmul.mubr.f32.gmra.mrb[0].mxu0 %v121
    %v285 = vpop.f32.mrb[0].mxu0
    %v286 = vadd.f32 %v58, %v285
    %v287 = vpop.f32.mrb[0].mxu0
    %288 = vmatprep.mubr.f32.mxu0 0.0
    %289 = vmatmul.mubr.f32.gmra.mrb[0].mxu0 %v123
    %v290 = vpop.f32.mrb[0].mxu0
    %v291 = vadd.f32 %v58, %v290
    %v292 = vpop.f32.mrb[0].mxu0
    %293 = vmatprep.mubr.f32.mxu0 0.0
    %294 = vmatmul.mubr.f32.gmra.mrb[0].mxu0 %v125
    %v295 = vpop.f32.mrb[0].mxu0
    %v296 = vadd.f32 %v58, %v295
    %v297 = vpop.f32.mrb[0].mxu0
    %298 = vmatprep.mubr.f32.mxu0 0.0
    %299 = vmatmul.mubr.f32.gmra.mrb[0].mxu0 %v127
    %v300 = vpop.f32.mrb[0].mxu0
    %v301 = vadd.f32 %v58, %v300
    %v302 = vpop.f32.mrb[0].mxu0
    %303 = vmatprep.mubr.f32.mxu0 0.0
    %304 = vmatmul.mubr.f32.gmra.mrb[0].mxu0 %v129
    %v305 = vpop.f32.mrb[0].mxu0
    %v306 = vadd.f32 %v58, %v305
    %v307 = vpop.f32.mrb[0].mxu0
    %308 = vmatprep.mubr.f32.mxu0 0.0
    %309 = vmatmul.mubr.f32.gmra.mrb[0].mxu0 %v131
    %v310 = vpop.f32.mrb[0].mxu0
    %v311 = vadd.f32 %v58, %v310
    %v312 = vpop.f32.mrb[0].mxu0
    %313 = vmatprep.mubr.f32.mxu0 0.0
    %314 = vmatmul.mubr.f32.gmra.mrb[0].mxu0 %v133
    %v315 = vpop.f32.mrb[0].mxu0
    %v316 = vadd.f32 %v58, %v315
    %v317 = vpop.f32.mrb[0].mxu0
    %318 = vmatprep.mubr.f32.mxu0 0.0
    %319 = vmatmul.mubr.f32.gmra.mrb[0].mxu0 %v135
    %v320 = vpop.f32.mrb[0].mxu0
    %v321 = vadd.f32 %v58, %v320
    %v322 = vpop.f32.mrb[0].mxu0
    %323 = vmatprep.mubr.f32.mxu0 0.0
    %324 = vmatmul.mubr.f32.gmra.mrb[0].mxu0 %v137
    %v325 = vpop.f32.mrb[0].mxu0
    %v326 = vadd.f32 %v58, %v325
    %v327 = vpop.f32.mrb[0].mxu0
    %328 = vmatprep.mubr.f32.mxu0 0.0
    %329 = vmatmul.mubr.f32.gmra.mrb[0].mxu0 %v139
    %v330 = vpop.f32.mrb[0].mxu0
    %v331 = vadd.f32 %v58, %v330
    %v332 = vpop.f32.mrb[0].mxu0
    %333 = vdwg.mxu0
    %334 = vmax.xlane.f32.xlu0 %v256
    %v335 = vpop.xlane.xlu0 %334
    %336 = vmax.xlane.f32.xlu0 %v261
    %v337 = vpop.xlane.xlu0 %336
    %338 = vmax.xlane.f32.xlu0 %v266
    %v339 = vpop.xlane.xlu0 %338
    %340 = vmax.xlane.f32.xlu0 %v271
    %v341 = vpop.xlane.xlu0 %340
    %342 = vmax.xlane.f32.xlu0 %v276
    %v343 = vpop.xlane.xlu0 %342
    %344 = vmax.xlane.f32.xlu0 %v281
    %v345 = vpop.xlane.xlu0 %344
    %346 = vmax.xlane.f32.xlu0 %v286
    %v347 = vpop.xlane.xlu0 %346
    %348 = vmax.xlane.f32.xlu0 %v291
    %v349 = vpop.xlane.xlu0 %348
    %350 = vmax.xlane.f32.xlu0 %v296
    %v351 = vpop.xlane.xlu0 %350
    %352 = vmax.xlane.f32.xlu0 %v301
    %v353 = vpop.xlane.xlu0 %352
    %354 = vmax.xlane.f32.xlu0 %v306
    %v355 = vpop.xlane.xlu0 %354
    %356 = vmax.xlane.f32.xlu0 %v311
    %v357 = vpop.xlane.xlu0 %356
    %358 = vmax.xlane.f32.xlu0 %v316
    %v359 = vpop.xlane.xlu0 %358
    %360 = vmax.xlane.f32.xlu0 %v321
    %v361 = vpop.xlane.xlu0 %360
    %362 = vmax.xlane.f32.xlu0 %v326
    %v363 = vpop.xlane.xlu0 %362
    %364 = vmax.xlane.f32.xlu0 %v331
    %v365 = vpop.xlane.xlu0 %364
    %v366 = vsub.f32 %v256, %v335
    %v367 = vsub.f32 %v261, %v337
    %v368 = vsub.f32 %v266, %v339
    %v369 = vsub.f32 %v271, %v341
    %v370 = vsub.f32 %v276, %v343
    %v371 = vsub.f32 %v281, %v345
    %v372 = vsub.f32 %v286, %v347
    %v373 = vsub.f32 %v291, %v349
    %v374 = vsub.f32 %v296, %v351
    %v375 = vsub.f32 %v301, %v353
    %v376 = vsub.f32 %v306, %v355
    %v377 = vsub.f32 %v311, %v357
    %v378 = vsub.f32 %v316, %v359
    %v379 = vsub.f32 %v321, %v361
    %v380 = vsub.f32 %v326, %v363
    %v381 = vsub.f32 %v331, %v365
    %v382 = vmul.f32 %v366, 1.442695
    %v383 = vpow.pop %v382
    %v384 = vmul.f32 %v367, 1.442695
    %v385 = vpow.pop %v384
    %v386 = vmul.f32 %v368, 1.442695
    %v387 = vpow.pop %v386
    %v388 = vmul.f32 %v369, 1.442695
    %v389 = vpow.pop %v388
    %v390 = vmul.f32 %v370, 1.442695
    %v391 = vpow.pop %v390
    %v392 = vmul.f32 %v371, 1.442695
    %v393 = vpow.pop %v392
    %v394 = vmul.f32 %v372, 1.442695
    %v395 = vpow.pop %v394
    %v396 = vmul.f32 %v373, 1.442695
    %v397 = vpow.pop %v396
    %v398 = vmul.f32 %v374, 1.442695
    %v399 = vpow.pop %v398
    %v400 = vmul.f32 %v375, 1.442695
    %v401 = vpow.pop %v400
    %v402 = vmul.f32 %v376, 1.442695
    %v403 = vpow.pop %v402
    %v404 = vmul.f32 %v377, 1.442695
    %v405 = vpow.pop %v404
    %v406 = vmul.f32 %v378, 1.442695
    %v407 = vpow.pop %v406
    %v408 = vmul.f32 %v379, 1.442695
    %v409 = vpow.pop %v408
    %v410 = vmul.f32 %v380, 1.442695
    %v411 = vpow.pop %v410
    %v412 = vmul.f32 %v381, 1.442695
    %v413 = vpow.pop %v412
    %414 = vadd.xlane.f32.xlu0 %v383
    %v415 = vpop.xlane.xlu0 %414
    %416 = vadd.xlane.f32.xlu0 %v385
    %v417 = vpop.xlane.xlu0 %416
    %418 = vadd.xlane.f32.xlu0 %v387
    %v419 = vpop.xlane.xlu0 %418
    %420 = vadd.xlane.f32.xlu0 %v389
    %v421 = vpop.xlane.xlu0 %420
    %422 = vadd.xlane.f32.xlu0 %v391
    %v423 = vpop.xlane.xlu0 %422
    %424 = vadd.xlane.f32.xlu0 %v393
    %v425 = vpop.xlane.xlu0 %424
    %426 = vadd.xlane.f32.xlu0 %v395
    %v427 = vpop.xlane.xlu0 %426
    %428 = vadd.xlane.f32.xlu0 %v397
    %v429 = vpop.xlane.xlu0 %428
    %430 = vadd.xlane.f32.xlu0 %v399
    %v431 = vpop.xlane.xlu0 %430
    %432 = vadd.xlane.f32.xlu0 %v401
    %v433 = vpop.xlane.xlu0 %432
    %434 = vadd.xlane.f32.xlu0 %v403
    %v435 = vpop.xlane.xlu0 %434
    %436 = vadd.xlane.f32.xlu0 %v405
    %v437 = vpop.xlane.xlu0 %436
    %438 = vadd.xlane.f32.xlu0 %v407
    %v439 = vpop.xlane.xlu0 %438
    %440 = vadd.xlane.f32.xlu0 %v409
    %v441 = vpop.xlane.xlu0 %440
    %442 = vadd.xlane.f32.xlu0 %v411
    %v443 = vpop.xlane.xlu0 %442
    %444 = vadd.xlane.f32.xlu0 %v413
    %v445 = vpop.xlane.xlu0 %444
    %v446 = vrcp.pop %v415
    %v447 = vrcp.pop %v417
    %v448 = vrcp.pop %v419
    %v449 = vrcp.pop %v421
    %v450 = vrcp.pop %v423
    %v451 = vrcp.pop %v425
    %v452 = vrcp.pop %v427
    %v453 = vrcp.pop %v429
    %v454 = vrcp.pop %v431
    %v455 = vrcp.pop %v433
    %v456 = vrcp.pop %v435
    %v457 = vrcp.pop %v437
    %v458 = vrcp.pop %v439
    %v459 = vrcp.pop %v441
    %v460 = vrcp.pop %v443
    %v461 = vrcp.pop %v445
    %v462 = vmul.f32 %v415, %v446
    %v463 = vmul.f32 %v417, %v447
    %v464 = vmul.f32 %v419, %v448
    %v465 = vmul.f32 %v421, %v449
    %v466 = vmul.f32 %v423, %v450
    %v467 = vmul.f32 %v425, %v451
    %v468 = vmul.f32 %v427, %v452
    %v469 = vmul.f32 %v429, %v453
    %v470 = vmul.f32 %v431, %v454
    %v471 = vmul.f32 %v433, %v455
    %v472 = vmul.f32 %v435, %v456
    %v473 = vmul.f32 %v437, %v457
    %v474 = vmul.f32 %v439, %v458
    %v475 = vmul.f32 %v441, %v459
    %v476 = vmul.f32 %v443, %v460
    %v477 = vmul.f32 %v445, %v461
    %v478 = vsub.f32 2.0, %v462
    %v479 = vsub.f32 2.0, %v463
    %v480 = vsub.f32 2.0, %v464
    %v481 = vsub.f32 2.0, %v465
    %v482 = vsub.f32 2.0, %v466
    %v483 = vsub.f32 2.0, %v467
    %v484 = vsub.f32 2.0, %v468
    %v485 = vsub.f32 2.0, %v469
    %v486 = vsub.f32 2.0, %v470
    %v487 = vsub.f32 2.0, %v471
    %v488 = vsub.f32 2.0, %v472
    %v489 = vsub.f32 2.0, %v473
    %v490 = vsub.f32 2.0, %v474
    %v491 = vsub.f32 2.0, %v475
    %v492 = vsub.f32 2.0, %v476
    %v493 = vsub.f32 2.0, %v477
    %v494 = vmul.f32 %v446, %v478
    %v495 = vmul.f32 %v447, %v479
    %v496 = vmul.f32 %v448, %v480
    %v497 = vmul.f32 %v449, %v481
    %v498 = vmul.f32 %v450, %v482
    %v499 = vmul.f32 %v451, %v483
    %v500 = vmul.f32 %v452, %v484
    %v501 = vmul.f32 %v453, %v485
    %v502 = vmul.f32 %v454, %v486
    %v503 = vmul.f32 %v455, %v487
    %v504 = vmul.f32 %v456, %v488
    %v505 = vmul.f32 %v457, %v489
    %v506 = vmul.f32 %v458, %v490
    %v507 = vmul.f32 %v459, %v491
    %v508 = vmul.f32 %v460, %v492
    %v509 = vmul.f32 %v461, %v493
    %v510 = vmul.f32 %v383, %v494
    %v511 = vmul.f32 %v385, %v495
    %v512 = vmul.f32 %v387, %v496
    %v513 = vmul.f32 %v389, %v497
    %v514 = vmul.f32 %v391, %v498
    %v515 = vmul.f32 %v393, %v499
    %v516 = vmul.f32 %v395, %v500
    %v517 = vmul.f32 %v397, %v501
    %v518 = vmul.f32 %v399, %v502
    %v519 = vmul.f32 %v401, %v503
    %v520 = vmul.f32 %v403, %v504
    %v521 = vmul.f32 %v405, %v505
    %v522 = vmul.f32 %v407, %v506
    %v523 = vmul.f32 %v409, %v507
    %v524 = vmul.f32 %v411, %v508
    %v525 = vmul.f32 %v413, %v509
    %526 = vrot.lane.b32.xlu0 %v21, 112
    %v527 = vpop.permute.xlu0 %526
    %528 = vrot.lane.b32.xlu0 %v22, 112
    %v529 = vpop.permute.xlu0 %528
    %530 = vrot.lane.b32.xlu0 %v23, 112
    %v531 = vpop.permute.xlu0 %530
    %532 = vrot.lane.b32.xlu0 %v24, 112
    %v533 = vpop.permute.xlu0 %532
    %534 = vrot.lane.b32.xlu0 %v25, 112
    %v535 = vpop.permute.xlu0 %534
    %536 = vrot.lane.b32.xlu0 %v26, 112
    %v537 = vpop.permute.xlu0 %536
    %538 = vrot.lane.b32.xlu0 %v27, 112
    %v539 = vpop.permute.xlu0 %538
    %540 = vrot.lane.b32.xlu0 %v28, 112
    %v541 = vpop.permute.xlu0 %540
    %542 = vrot.lane.b32.xlu0 %v29, 112
    %v543 = vpop.permute.xlu0 %542
    %544 = vrot.lane.b32.xlu0 %v30, 112
    %v545 = vpop.permute.xlu0 %544
    %546 = vrot.lane.b32.xlu0 %v31, 112
    %v547 = vpop.permute.xlu0 %546
    %548 = vrot.lane.b32.xlu0 %v32, 112
    %v549 = vpop.permute.xlu0 %548
    %550 = vrot.lane.b32.xlu0 %v33, 112
    %v551 = vpop.permute.xlu0 %550
    %552 = vrot.lane.b32.xlu0 %v34, 112
    %v553 = vpop.permute.xlu0 %552
    %554 = vrot.lane.b32.xlu0 %v35, 112
    %v555 = vpop.permute.xlu0 %554
    %556 = vrot.lane.b32.xlu0 %v36, 112
    %v557 = vpop.permute.xlu0 %556
    %574 = vmatprep.subr.mxu0 0.0
    %575 = vmatpush1.msra.mxu0 %v527
    %576 = vmatprep.subr.mxu0 0.0
    %577 = vmatpush1.msra.mxu0 %v529
    %578 = vmatprep.subr.mxu0 0.0
    %579 = vmatpush1.msra.mxu0 %v531
    %580 = vmatprep.subr.mxu0 0.0
    %581 = vmatpush1.msra.mxu0 %v533
    %582 = vmatprep.subr.mxu0 0.0
    %583 = vmatpush1.msra.mxu0 %v535
    %584 = vmatprep.subr.mxu0 0.0
    %585 = vmatpush1.msra.mxu0 %v537
    %586 = vmatprep.subr.mxu0 0.0
    %587 = vmatpush1.msra.mxu0 %v539
    %588 = vmatprep.subr.mxu0 0.0
    %589 = vmatpush1.msra.mxu0 %v541
    %590 = vmatprep.subr.mxu0 0.0
    %591 = vmatpush1.msra.mxu0 %v543
    %592 = vmatprep.subr.mxu0 0.0
    %593 = vmatpush1.msra.mxu0 %v545
    %594 = vmatprep.subr.mxu0 0.0
    %595 = vmatpush1.msra.mxu0 %v547
    %596 = vmatprep.subr.mxu0 0.0
    %597 = vmatpush1.msra.mxu0 %v549
    %598 = vmatprep.subr.mxu0 0.0
    %599 = vmatpush1.msra.mxu0 %v551
    %600 = vmatprep.subr.mxu0 0.0
    %601 = vmatpush1.msra.mxu0 %v553
    %602 = vmatprep.subr.mxu0 0.0
    %603 = vmatpush1.msra.mxu0 %v555
    %604 = vmatprep.subr.mxu0 0.0
    %605 = vmatpush1.msra.mxu0 %v557
    %606 = vmatprep.subr.mxu0 0.0
    %607 = vmatpush1.msra.mxu0 0.0
    %608 = vmatprep.subr.mxu0 0.0
    %609 = vmatpush1.msra.mxu0 0.0
    %610 = vmatprep.subr.mxu0 0.0
    %611 = vmatpush1.msra.mxu0 0.0
    %612 = vmatprep.subr.mxu0 0.0
    %613 = vmatpush1.msra.mxu0 0.0
    %614 = vmatprep.subr.mxu0 0.0
    %615 = vmatpush1.msra.mxu0 0.0
    %616 = vmatprep.subr.mxu0 0.0
    %617 = vmatpush1.msra.mxu0 0.0
    %618 = vmatprep.subr.mxu0 0.0
    %619 = vmatpush1.msra.mxu0 0.0
    %620 = vmatprep.subr.mxu0 0.0
    %621 = vmatpush1.msra.mxu0 0.0
    %622 = vmatprep.subr.mxu0 0.0
    %623 = vmatpush1.msra.mxu0 0.0
    %624 = vmatprep.subr.mxu0 0.0
    %625 = vmatpush1.msra.mxu0 0.0
    %626 = vmatprep.subr.mxu0 0.0
    %627 = vmatpush1.msra.mxu0 0.0
    %628 = vmatprep.subr.mxu0 0.0
    %629 = vmatpush1.msra.mxu0 0.0
    %630 = vmatprep.subr.mxu0 0.0
    %631 = vmatpush1.msra.mxu0 0.0
    %632 = vmatprep.subr.mxu0 0.0
    %633 = vmatpush1.msra.mxu0 0.0
    %634 = vmatprep.subr.mxu0 0.0
    %635 = vmatpush1.msra.mxu0 0.0
    %636 = vmatprep.subr.mxu0 0.0
    %637 = vmatpush1.msra.mxu0 0.0
    %638 = vmatprep.mubr.f32.mxu0 0.0
    %639 = vmatmul.mubr.f32.gmra.mrb[0].mxu0 %v510
    %v640 = vpop.f32.mrb[0].mxu0
    %v641 = vadd.f32 0.0, %v640
    %v642 = vpop.f32.mrb[0].mxu0
    %643 = vmatprep.mubr.f32.mxu0 0.0
    %644 = vmatmul.mubr.f32.gmra.mrb[0].mxu0 %v511
    %v645 = vpop.f32.mrb[0].mxu0
    %v646 = vadd.f32 0.0, %v645
    %v647 = vpop.f32.mrb[0].mxu0
    %648 = vmatprep.mubr.f32.mxu0 0.0
    %649 = vmatmul.mubr.f32.gmra.mrb[0].mxu0 %v512
    %v650 = vpop.f32.mrb[0].mxu0
    %v651 = vadd.f32 0.0, %v650
    %v652 = vpop.f32.mrb[0].mxu0
    %653 = vmatprep.mubr.f32.mxu0 0.0
    %654 = vmatmul.mubr.f32.gmra.mrb[0].mxu0 %v513
    %v655 = vpop.f32.mrb[0].mxu0
    %v656 = vadd.f32 0.0, %v655
    %v657 = vpop.f32.mrb[0].mxu0
    %658 = vmatprep.mubr.f32.mxu0 0.0
    %659 = vmatmul.mubr.f32.gmra.mrb[0].mxu0 %v514
    %v660 = vpop.f32.mrb[0].mxu0
    %v661 = vadd.f32 0.0, %v660
    %v662 = vpop.f32.mrb[0].mxu0
    %663 = vmatprep.mubr.f32.mxu0 0.0
    %664 = vmatmul.mubr.f32.gmra.mrb[0].mxu0 %v515
    %v665 = vpop.f32.mrb[0].mxu0
    %v666 = vadd.f32 0.0, %v665
    %v667 = vpop.f32.mrb[0].mxu0
    %668 = vmatprep.mubr.f32.mxu0 0.0
    %669 = vmatmul.mubr.f32.gmra.mrb[0].mxu0 %v516
    %v670 = vpop.f32.mrb[0].mxu0
    %v671 = vadd.f32 0.0, %v670
    %v672 = vpop.f32.mrb[0].mxu0
    %673 = vmatprep.mubr.f32.mxu0 0.0
    %674 = vmatmul.mubr.f32.gmra.mrb[0].mxu0 %v517
    %v675 = vpop.f32.mrb[0].mxu0
    %v676 = vadd.f32 0.0, %v675
    %v677 = vpop.f32.mrb[0].mxu0
    %678 = vmatprep.mubr.f32.mxu0 0.0
    %679 = vmatmul.mubr.f32.gmra.mrb[0].mxu0 %v518
    %v680 = vpop.f32.mrb[0].mxu0
    %v681 = vadd.f32 0.0, %v680
    %v682 = vpop.f32.mrb[0].mxu0
    %683 = vmatprep.mubr.f32.mxu0 0.0
    %684 = vmatmul.mubr.f32.gmra.mrb[0].mxu0 %v519
    %v685 = vpop.f32.mrb[0].mxu0
    %v686 = vadd.f32 0.0, %v685
    %v687 = vpop.f32.mrb[0].mxu0
    %688 = vmatprep.mubr.f32.mxu0 0.0
    %689 = vmatmul.mubr.f32.gmra.mrb[0].mxu0 %v520
    %v690 = vpop.f32.mrb[0].mxu0
    %v691 = vadd.f32 0.0, %v690
    %v692 = vpop.f32.mrb[0].mxu0
    %693 = vmatprep.mubr.f32.mxu0 0.0
    %694 = vmatmul.mubr.f32.gmra.mrb[0].mxu0 %v521
    %v695 = vpop.f32.mrb[0].mxu0
    %v696 = vadd.f32 0.0, %v695
    %v697 = vpop.f32.mrb[0].mxu0
    %698 = vmatprep.mubr.f32.mxu0 0.0
    %699 = vmatmul.mubr.f32.gmra.mrb[0].mxu0 %v522
    %v700 = vpop.f32.mrb[0].mxu0
    %v701 = vadd.f32 0.0, %v700
    %v702 = vpop.f32.mrb[0].mxu0
    %703 = vmatprep.mubr.f32.mxu0 0.0
    %704 = vmatmul.mubr.f32.gmra.mrb[0].mxu0 %v523
    %v705 = vpop.f32.mrb[0].mxu0
    %v706 = vadd.f32 0.0, %v705
    %v707 = vpop.f32.mrb[0].mxu0
    %708 = vmatprep.mubr.f32.mxu0 0.0
    %709 = vmatmul.mubr.f32.gmra.mrb[0].mxu0 %v524
    %v710 = vpop.f32.mrb[0].mxu0
    %v711 = vadd.f32 0.0, %v710
    %v712 = vpop.f32.mrb[0].mxu0
    %713 = vmatprep.mubr.f32.mxu0 0.0
    %714 = vmatmul.mubr.f32.gmra.mrb[0].mxu0 %v525
    %v715 = vpop.f32.mrb[0].mxu0
    %v716 = vadd.f32 0.0, %v715
    %v717 = vpop.f32.mrb[0].mxu0
    %718 = vdwg.mxu0
    %v719 = vld [vmem:[%s3] sm:$0xff]
    %v720 = vld [vmem:[%s3 + $0x8] sm:$0xff]
    %v721 = vld [vmem:[%s3 + $0x10] sm:$0xff]
    %v722 = vld [vmem:[%s3 + $0x18] sm:$0xff]
    %v723 = vld [vmem:[%s3 + $0x20] sm:$0xff]
    %v724 = vld [vmem:[%s3 + $0x28] sm:$0xff]
    %v725 = vld [vmem:[%s4] sm:$0xff]
    %v726 = vld [vmem:[%s4 + $0x8] sm:$0xff]
    %v727 = vld [vmem:[%s4 + $0x10] sm:$0xff]
    %v728 = vld [vmem:[%s4 + $0x18] sm:$0xff]
    %v729 = vld [vmem:[%s4 + $0x20] sm:$0xff]
    %v730 = vld [vmem:[%s4 + $0x28] sm:$0xff]
    %732 = vset.pattern.permute.xlu0 0
    %733 = vperm.xlu0 %732, %v725
    %v734 = vpop.permute.xlu0 %733
    %737 = vset.pattern.permute.xlu0 0
    %738 = vperm.xlu0 %737, %v726
    %v739 = vpop.permute.xlu0 %738
    %742 = vset.pattern.permute.xlu0 0
    %743 = vperm.xlu0 %742, %v727
    %v744 = vpop.permute.xlu0 %743
    %747 = vset.pattern.permute.xlu0 0
    %748 = vperm.xlu0 %747, %v728
    %v749 = vpop.permute.xlu0 %748
    %752 = vset.pattern.permute.xlu0 0
    %753 = vperm.xlu0 %752, %v729
    %v754 = vpop.permute.xlu0 %753
    %757 = vset.pattern.permute.xlu0 0
    %758 = vperm.xlu0 %757, %v730
    %v759 = vpop.permute.xlu0 %758
    %v762 = vsel %vm108, %v719, 0
    %v765 = vsel %vm108, %v720, 0
    %v768 = vsel %vm108, %v721, 0
    %v771 = vsel %vm108, %v722, 0
    %v774 = vsel %vm108, %v723, 0
    %v777 = vsel %vm108, %v724, 0
    %v780 = vsel %vm108, %v641, 0
    %v783 = vsel %vm108, %v646, 0
    %v786 = vsel %vm108, %v651, 0
    %v789 = vsel %vm108, %v656, 0
    %v792 = vsel %vm108, %v661, 0
    %v795 = vsel %vm108, %v666, 0
    %v798 = vsel %vm108, %v671, 0
    %v801 = vsel %vm108, %v676, 0
    %v804 = vsel %vm108, %v681, 0
    %v807 = vsel %vm108, %v686, 0
    %v810 = vsel %vm108, %v691, 0
    %v813 = vsel %vm108, %v696, 0
    %v816 = vsel %vm108, %v701, 0
    %v819 = vsel %vm108, %v706, 0
    %v822 = vsel %vm108, %v711, 0
    %v825 = vsel %vm108, %v716, 0
    %827 = vmatprep.subr.mxu0 0.0
    %828 = vmatpush1.xpose.msra.mxu0 %v780
    %829 = vmatprep.subr.mxu0 0.0
    %830 = vmatpush1.xpose.msra.mxu0 %v783
    %831 = vmatprep.subr.mxu0 0.0
    %832 = vmatpush1.xpose.msra.mxu0 %v786
    %833 = vmatprep.subr.mxu0 0.0
    %834 = vmatpush1.xpose.msra.mxu0 %v789
    %835 = vmatprep.subr.mxu0 0.0
    %836 = vmatpush1.xpose.msra.mxu0 %v792
    %837 = vmatprep.subr.mxu0 0.0
    %838 = vmatpush1.xpose.msra.mxu0 %v795
    %839 = vmatprep.subr.mxu0 0.0
    %840 = vmatpush1.xpose.msra.mxu0 %v798
    %841 = vmatprep.subr.mxu0 0.0
    %842 = vmatpush1.xpose.msra.mxu0 %v801
    %843 = vmatprep.subr.mxu0 0.0
    %844 = vmatpush1.xpose.msra.mxu0 %v804
    %845 = vmatprep.subr.mxu0 0.0
    %846 = vmatpush1.xpose.msra.mxu0 %v807
    %847 = vmatprep.subr.mxu0 0.0
    %848 = vmatpush1.xpose.msra.mxu0 %v810
    %849 = vmatprep.subr.mxu0 0.0
    %850 = vmatpush1.xpose.msra.mxu0 %v813
    %851 = vmatprep.subr.mxu0 0.0
    %852 = vmatpush1.xpose.msra.mxu0 %v816
    %853 = vmatprep.subr.mxu0 0.0
    %854 = vmatpush1.xpose.msra.mxu0 %v819
    %855 = vmatprep.subr.mxu0 0.0
    %856 = vmatpush1.xpose.msra.mxu0 %v822
    %857 = vmatprep.subr.mxu0 0.0
    %858 = vmatpush1.xpose.msra.mxu0 %v825
    %859 = vmatprep.subr.mxu0 0.0
    %860 = vmatpush1.xpose.msra.mxu0 0.0
    %861 = vmatprep.subr.mxu0 0.0
    %862 = vmatpush1.xpose.msra.mxu0 0.0
    %863 = vmatprep.subr.mxu0 0.0
    %864 = vmatpush1.xpose.msra.mxu0 0.0
    %865 = vmatprep.subr.mxu0 0.0
    %866 = vmatpush1.xpose.msra.mxu0 0.0
    %867 = vmatprep.subr.mxu0 0.0
    %868 = vmatpush1.xpose.msra.mxu0 0.0
    %869 = vmatprep.subr.mxu0 0.0
    %870 = vmatpush1.xpose.msra.mxu0 0.0
    %871 = vmatprep.subr.mxu0 0.0
    %872 = vmatpush1.xpose.msra.mxu0 0.0
    %873 = vmatprep.subr.mxu0 0.0
    %874 = vmatpush1.xpose.msra.mxu0 0.0
    %875 = vmatprep.subr.mxu0 0.0
    %876 = vmatpush1.xpose.msra.mxu0 0.0
    %877 = vmatprep.subr.mxu0 0.0
    %878 = vmatpush1.xpose.msra.mxu0 0.0
    %879 = vmatprep.subr.mxu0 0.0
    %880 = vmatpush1.xpose.msra.mxu0 0.0
    %881 = vmatprep.subr.mxu0 0.0
    %882 = vmatpush1.xpose.msra.mxu0 0.0
    %883 = vmatprep.subr.mxu0 0.0
    %884 = vmatpush1.xpose.msra.mxu0 0.0
    %885 = vmatprep.subr.mxu0 0.0
    %886 = vmatpush1.xpose.msra.mxu0 0.0
    %887 = vmatprep.subr.mxu0 0.0
    %888 = vmatpush1.xpose.msra.mxu0 0.0
    %889 = vmatprep.subr.mxu0 0.0
    %890 = vmatpush1.xpose.msra.mxu0 0.0
    %891 = vmatprep.mubr.f32.mxu0 0.0
    %892 = vmatmul.mubr.f32.gmra.mrb[0].mxu0 %v762
    %v893 = vpop.f32.mrb[0].mxu0
    %v894 = vadd.f32 %v734, %v893
    %v895 = vpop.f32.mrb[0].mxu0
    %896 = vmatprep.mubr.f32.mxu0 0.0
    %897 = vmatmul.mubr.f32.gmra.mrb[0].mxu0 %v765
    %v898 = vpop.f32.mrb[0].mxu0
    %v899 = vadd.f32 %v739, %v898
    %v900 = vpop.f32.mrb[0].mxu0
    %901 = vmatprep.mubr.f32.mxu0 0.0
    %902 = vmatmul.mubr.f32.gmra.mrb[0].mxu0 %v768
    %v903 = vpop.f32.mrb[0].mxu0
    %v904 = vadd.f32 %v744, %v903
    %v905 = vpop.f32.mrb[0].mxu0
    %906 = vmatprep.mubr.f32.mxu0 0.0
    %907 = vmatmul.mubr.f32.gmra.mrb[0].mxu0 %v771
    %v908 = vpop.f32.mrb[0].mxu0
    %v909 = vadd.f32 %v749, %v908
    %v910 = vpop.f32.mrb[0].mxu0
    %911 = vmatprep.mubr.f32.mxu0 0.0
    %912 = vmatmul.mubr.f32.gmra.mrb[0].mxu0 %v774
    %v913 = vpop.f32.mrb[0].mxu0
    %v914 = vadd.f32 %v754, %v913
    %v915 = vpop.f32.mrb[0].mxu0
    %916 = vmatprep.mubr.f32.mxu0 0.0
    %917 = vmatmul.mubr.f32.gmra.mrb[0].mxu0 %v777
    %v918 = vpop.f32.mrb[0].mxu0
    %v919 = vadd.f32 %v759, %v918
    %v920 = vpop.f32.mrb[0].mxu0
    %921 = vdwg.mxu0
    %922 = vst [vmem:[#allocation2] sm:$0xff] %v894
    %923 = vst [vmem:[#allocation2 + $0x8] sm:$0xff] %v899
    %924 = vst [vmem:[#allocation2 + $0x10] sm:$0xff] %v904
    %925 = vst [vmem:[#allocation2 + $0x18] sm:$0xff] %v909
    %926 = vst [vmem:[#allocation2 + $0x20] sm:$0xff] %v914
    %927 = vst [vmem:[#allocation2 + $0x28] sm:$0xff] %v919
    // Predicated region
    $region22: #{tpu_custom_call.1} parent=1 // pred_check
      _
    $region23: #{tpu_custom_call.1} parent=1 // pred_check_branch
      %929 = sbr.rel (0) target = $region25
    $region24: #{tpu_custom_call.1} parent=1 // pred_region
      %s931 = ssub.s32 768, 768
      %932 = vsyncadd [#allocation3], %s931
      %s933 = sshll.u32 [#allocation2], 4
      %s934 = int_to_ptr.vmem [resolvable:$true] %s933
      %939 = dma.vmem_to_hbm [thread:$0]  %s934, 768, %s5, [#allocation3], 128, 128, 8
    $region25: #{tpu_custom_call.1} parent=1 // pred_fallthru
      _
    // Predicated region
    $region26: #{tpu_custom_call.1} parent=1 // pred_check
      _
    $region27: #{tpu_custom_call.1} parent=1 // pred_check_branch
      %941 = sbr.rel (0) target = $region29
    $region28: #{tpu_custom_call.1} parent=1 // pred_region
      %942 = dma.done [#allocation3], 768
    $region29: #{tpu_custom_call.1} parent=1 // pred_fallthru
      _
    %943 = vsyncpa [#allocation3], 1

</llo_original>
